<compile_context>
chip_gen: v7x
topology: tpu7x:2x2x1
jax: 0.10.0
libtpu: 0.0.40
codegen_flags: <defaults>
</compile_context>

<pallas_src>
import numpy as np
import jax
import jax.numpy as jnp
from jax.experimental import pallas as pl
from jax.experimental.pallas import tpu as pltpu


def _round_up(x, m):
    return ((x + m - 1) // m) * m


def _build_masks(H, W):
    """Width-boundary masks for the flattened (h*W + w) layout: (2, H*W)."""
    w_idx = np.arange(H * W, dtype=np.int64) % W
    return np.stack([(w_idx != 0), (w_idx != W - 1)]).astype(np.float32)


def _make_resblock_kernel(H, W, B_tile, Cpad, groups_pad, cg, PAD, PAD_R, eps=1e-5):
    HW = H * W
    cnt = float(cg * HW)
    TAPS = [(dy, dx) for dy in (-1, 0, 1) for dx in (-1, 0, 1)]

    def kernel(x_ref, m_ref, g1_ref, b1_ref, w1_ref, g2_ref, b2_ref, w2_ref,
               o_ref, buf_ref, col_ref):
        # Boundary masks (bf16 0/1, exact), hoisted out of the tap loops.
        masks = m_ref[...]
        m0 = masks[0:1, :]      # kills w == 0     (dx == -1 taps)
        m1 = masks[1:2, :]      # kills w == W - 1 (dx == +1 taps)

        # Zero the halo columns once per program (image region overwritten below).
        buf_ref[:, :PAD] = jnp.zeros((B_tile * Cpad, PAD), jnp.bfloat16)
        buf_ref[:, PAD + HW:] = jnp.zeros((B_tile * Cpad, PAD_R), jnp.bfloat16)

        def gn_relu_to_buf(v, gamma, beta, b):
            # v: (Cpad, HW) f32.  Exact two-pass GroupNorm in f32; padded channels
            # (zero input, zero gamma/beta) produce exactly zero activations.
            ch_sum = jnp.sum(v, axis=1, keepdims=True)                       # (Cpad,1)
            g_sum = jnp.sum(ch_sum.reshape(groups_pad, cg), axis=1, keepdims=True)
            mean_c = jnp.broadcast_to(g_sum / cnt, (groups_pad, cg)).reshape(Cpad, 1)
            centered = v - mean_c
            ch_ss = jnp.sum(centered * centered, axis=1, keepdims=True)      # (Cpad,1)
            g_ss = jnp.sum(ch_ss.reshape(groups_pad, cg), axis=1, keepdims=True)
            inv_c = jnp.broadcast_to(jax.lax.rsqrt(g_ss / cnt + eps),
                                     (groups_pad, cg)).reshape(Cpad, 1)
            act = jnp.maximum(centered * (inv_c * gamma) + beta, 0.0)
            # bf16 activation into the zero-padded image buffer (sublane/lane aligned).
            buf_ref[b * Cpad:(b + 1) * Cpad, PAD:PAD + HW] = act.astype(jnp.bfloat16)

        def conv3x3(w_ref):
            # im2col from static lane-slices of the bf16 padded-image buffer, then
            # ONE bf16 GEMM with f32 accumulation: (Cpad, 9*Cpad) x (9*Cpad, B*HW).
            for b in range(B_tile):
                r0 = b * Cpad
                c0 = b * HW
                for t, (dy, dx) in enumerate(TAPS):
                    d = dy * W + dx
                    tap = buf_ref[r0:r0 + Cpad, PAD + d:PAD + d + HW]
                    if dx == -1:
                        tap = tap * m0
                    elif dx == 1:
                        tap = tap * m1
                    col_ref[t * Cpad:(t + 1) * Cpad, c0:c0 + HW] = tap
            # TODO(synk): on v7x, evaluate 9 per-tap matmuls accumulating in the MRB
            # to drop col_ref entirely (removes the 9x im2col stores / VMEM).
            return jnp.dot(w_ref[...], col_ref[...],
                           preferred_element_type=jnp.float32)

        g1 = g1_ref[...]
        b1 = b1_ref[...]
        g2 = g2_ref[...]
        b2 = b2_ref[...]

        for b in range(B_tile):
            gn_relu_to_buf(x_ref[b], g1, b1, b)
        h = conv3x3(w1_ref)                              # (Cpad, B_tile*HW) f32
        for b in range(B_tile):
            gn_relu_to_buf(h[:, b * HW:(b + 1) * HW], g2, b2, b)
        y = conv3x3(w2_ref)                              # (Cpad, B_tile*HW) f32
        for b in range(B_tile):                          # residual, lane-dense store
            o_ref[b] = y[:, b * HW:(b + 1) * HW] + x_ref[b]

    return kernel


def make_resblock(params, H, W, eps=1e-5):
    """Build a jitted ResBlock forward.  All weight/constant prep is done here."""
    g1, b1, w1, g2, b2, w2 = (params[k] for k in
                              ("gamma1", "beta1", "w1", "gamma2", "beta2", "w2"))
    C = int(w1.shape[1])
    Cout = int(w1.shape[0])
    assert Cout == C and int(w2.shape[0]) == C and int(w2.shape[1]) == C, \
        "this ResBlock variant requires planes == inplanes (stride=1, no downsample)"
    groups = min(32, C)
    assert C % groups == 0, "GroupNorm needs C % groups == 0"
    cg = C // groups
    HW = H * W

    # Pad channels to a multiple of 16 -> bf16 sublane-aligned im2col tap chunks.
    Cpad = _round_up(C, 16)
    assert (Cpad - C) % cg == 0      # holds for every valid GroupNorm config
    groups_pad = groups + (Cpad - C) // cg

    PAD = _round_up(W + 1, 128)      # left halo (lane aligned, >= W+1)
    PAD_R = PAD                      # right halo (>= W+1), keeps BUFW lane-round
    BUFW = PAD + HW + PAD_R

    def pad_vec(v):
        out = np.zeros((Cpad, 1), np.float32)
        out[:C, 0] = np.asarray(v, np.float32).reshape(C)
        return jnp.asarray(out)

    def pack_weight(w):
        # OIHW -> (O, kH, kW, I) -> zero-pad channels -> (Cpad, 9*Cpad) bf16.
        # Column order (ky, kx, ci) matches the kernel's im2col row order.
        w_np = np.asarray(w, np.float32).transpose(0, 2, 3, 1)    # (O,3,3,I)
        w_pad = np.zeros((Cpad, 3, 3, Cpad), np.float32)
        w_pad[:C, :, :, :C] = w_np
        return jnp.asarray(w_pad.reshape(Cpad, 9 * Cpad), dtype=jnp.bfloat16)

    masks = jnp.asarray(_build_masks(H, W), dtype=jnp.bfloat16)   # (2, HW)
    g1_c, b1_c = pad_vec(g1), pad_vec(b1)
    g2_c, b2_c = pad_vec(g2), pad_vec(b2)
    w1_2d, w2_2d = pack_weight(w1), pack_weight(w2)

    def vmem_bytes(B):
        act = Cpad * HW * 4
        return (2 * 2 * B * act                       # x + out blocks (double-buffered)
                + 2 * 2 * (Cpad * 9 * Cpad * 2)       # both bf16 conv weights
                + 2 * (2 * HW * 2 + 4 * Cpad * 4)     # masks + gamma/beta
                + B * Cpad * BUFW * 2                 # bf16 padded-image scratch
                + 9 * Cpad * B * HW * 2               # bf16 im2col scratch
                + 5 * B * act)                        # live f32 temporaries headroom

    def forward_impl(x_nchw):
        N, Cx, Hx, Wx = x_nchw.shape
        assert (Cx, Hx, Wx) == (C, H, W), "input shape mismatch with prepared params"

        # Chip-aware VMEM capacity (128 MiB on v5e/v6e, 64 MiB on v7x).
        cap = 56 * 1024 * 1024                        # conservative (v7x-safe) fallback
        try:
            vc = getattr(pltpu.get_tpu_info(), "vmem_capacity_bytes", None)
            if vc:
                cap = int(0.85 * int(vc))
        except Exception:
            pass

        # Images per program: as many as fit, but keep >= 2 programs when N > 1 so
        # both TensorCores / megacore halves get work.
        B_tile = 1
        budget = int(0.75 * cap)
        for b in range(1, min(N, 8) + 1):
            if N % b:
                continue
            if N > 1 and N // b < 2:
                continue
            if vmem_bytes(b) <= budget:
                B_tile = b
        # TODO(synk): for N == 1 or very large C*HW, add a spatial-tile grid axis
        # (row halo + precomputed GN stats) as a second "parallel" dimension, and
        # pad HW to a multiple of 128 when it is not already lane-dense.

        vmem_limit = int(min(cap, max(32 * 1024 * 1024, int(1.3 * vmem_bytes(B_tile)))))

        x_flat = x_nchw.reshape(N, C, HW).astype(jnp.float32)     # free reshape
        if Cpad != C:
            x_flat = jnp.pad(x_flat, ((0, 0), (0, Cpad - C), (0, 0)))

        kernel = _make_resblock_kernel(H, W, B_tile, Cpad, groups_pad, cg,
                                       PAD, PAD_R, eps)

        full = lambda shape: pl.BlockSpec(shape, lambda n: tuple(0 for _ in shape))

        out_flat = pl.pallas_call(
            kernel,
            out_shape=jax.ShapeDtypeStruct((N, Cpad, HW), jnp.float32),
            grid_spec=pltpu.PrefetchScalarGridSpec(
                num_scalar_prefetch=0,
                grid=(N // B_tile,),
                in_specs=[
                    pl.BlockSpec((B_tile, Cpad, HW), lambda n: (n, 0, 0)),   # x
                    full((2, HW)),                                           # masks
                    full((Cpad, 1)), full((Cpad, 1)), full((Cpad, 9 * Cpad)),  # GN1+conv1
                    full((Cpad, 1)), full((Cpad, 1)), full((Cpad, 9 * Cpad)),  # GN2+conv2
                ],
                out_specs=pl.BlockSpec((B_tile, Cpad, HW), lambda n: (n, 0, 0)),
                scratch_shapes=[
                    pltpu.VMEM((B_tile * Cpad, BUFW), jnp.bfloat16),   # padded images
                    pltpu.VMEM((9 * Cpad, B_tile * HW), jnp.bfloat16),  # im2col matrix
                ],
            ),
            compiler_params=pltpu.CompilerParams(
                dimension_semantics=("parallel",),
                vmem_limit_bytes=vmem_limit,
            ),
        )(x_flat, masks, g1_c, b1_c, w1_2d, g2_c, b2_c, w2_2d)

        out = out_flat[:, :C, :] if Cpad != C else out_flat
        return out.reshape(N, C, H, W)

    return jax.jit(forward_impl)


# ---------------- pure-JAX reference (for correctness check) ----------------
def _group_norm_ref(x, gamma, beta, groups, eps=1e-5):
    N, C, H, W = x.shape
    xg = x.reshape(N, groups, C // groups, H, W)
    mean = xg.mean(axis=(2, 3, 4), keepdims=True)
    var = ((xg - mean) ** 2).mean(axis=(2, 3, 4), keepdims=True)
    xn = ((xg - mean) / jnp.sqrt(var + eps)).reshape(N, C, H, W)
    return xn * gamma[None, :, None, None] + beta[None, :, None, None]


def _conv3x3_ref(x, w):
    return jax.lax.conv_general_dilated(
        x, w, window_strides=(1, 1), padding=((1, 1), (1, 1)),
        dimension_numbers=("NCHW", "OIHW", "NCHW"),
        precision=jax.lax.Precision.HIGHEST)


def resblock_ref(x, params):
    C = x.shape[1]
    out = jnp.maximum(_group_norm_ref(x, params["gamma1"], params["beta1"], min(32, C)), 0.0)
    out = _conv3x3_ref(out, params["w1"])
    out = _group_norm_ref(out, params["gamma2"], params["beta2"], min(32, out.shape[1]))
    out = jnp.maximum(out, 0.0)
    out = _conv3x3_ref(out, params["w2"])
    return out + x


if __name__ == "__main__":
    # Shapes consistent with ResBlock(inplanes=4, planes=4), stride=1, no downsample.
    N, C, H, W = 2, 4, 16, 16
    key = jax.random.PRNGKey(0)
    kx, kw1, kw2, kg1, kb1, kg2, kb2 = jax.random.split(key, 7)

    x = jax.random.normal(kx, (N, C, H, W), jnp.float32)
    params = {
        "gamma1": 1.0 + 0.1 * jax.random.normal(kg1, (C,), jnp.float32),
        "beta1": 0.1 * jax.random.normal(kb1, (C,), jnp.float32),
        "gamma2": 1.0 + 0.1 * jax.random.normal(kg2, (C,), jnp.float32),
        "beta2": 0.1 * jax.random.normal(kb2, (C,), jnp.float32),
        # conv3x3 weights, PyTorch OIHW layout, bias=False
        "w1": 0.2 * jax.random.normal(kw1, (C, C, 3, 3), jnp.float32),
        "w2": 0.2 * jax.random.normal(kw2, (C, C, 3, 3), jnp.float32),
    }

    resblock = make_resblock(params, H, W)          # param prep hoisted here
    out = jax.block_until_ready(resblock(x))
    ref = jax.block_until_ready(resblock_ref(x, params))

    # bf16 conv operands (f32 accumulation) -> relaxed tolerance vs. f32 reference.
    if not jnp.allclose(out, ref, rtol=3e-2, atol=3e-2):
        raise AssertionError(
            f"mismatch: max abs err = {float(jnp.max(jnp.abs(out - ref)))}")
    print("KERNEL_OK")
</pallas_src>

<mosaic_0001>
module attributes {stable_mosaic.version = 11 : i64} {
  func.func @kernel(%arg0: i32, %arg1: memref<1x16x256xf32, #tpu.memory_space<vmem>>, %arg2: memref<2x256xbf16, #tpu.memory_space<vmem>>, %arg3: memref<16x1xf32, #tpu.memory_space<vmem>>, %arg4: memref<16x1xf32, #tpu.memory_space<vmem>>, %arg5: memref<16x144xbf16, #tpu.memory_space<vmem>>, %arg6: memref<16x1xf32, #tpu.memory_space<vmem>>, %arg7: memref<16x1xf32, #tpu.memory_space<vmem>>, %arg8: memref<16x144xbf16, #tpu.memory_space<vmem>>, %arg9: memref<1x16x256xf32, #tpu.memory_space<vmem>>, %arg10: memref<16x512xbf16, #tpu.memory_space<vmem>>, %arg11: memref<144x256xbf16, #tpu.memory_space<vmem>>) attributes {dimension_semantics = [#tpu.dimension_semantics<parallel>], iteration_bounds = array<i64: 2>, scalar_prefetch = 0 : i64, scratch_operands = 2 : i64, tpu.core_type = #tpu.core_type<tc>, window_params = [{transform_indices = @transform_0, window_bounds = array<i64: 1, 16, 256>}, {pipeline_mode = #tpu.pipeline_mode<synchronous>, transform_indices = @transform_1, window_bounds = array<i64: 2, 256>}, {pipeline_mode = #tpu.pipeline_mode<synchronous>, transform_indices = @transform_2, window_bounds = array<i64: 16, 1>}, {pipeline_mode = #tpu.pipeline_mode<synchronous>, transform_indices = @transform_3, window_bounds = array<i64: 16, 1>}, {pipeline_mode = #tpu.pipeline_mode<synchronous>, transform_indices = @transform_4, window_bounds = array<i64: 16, 144>}, {pipeline_mode = #tpu.pipeline_mode<synchronous>, transform_indices = @transform_5, window_bounds = array<i64: 16, 1>}, {pipeline_mode = #tpu.pipeline_mode<synchronous>, transform_indices = @transform_6, window_bounds = array<i64: 16, 1>}, {pipeline_mode = #tpu.pipeline_mode<synchronous>, transform_indices = @transform_7, window_bounds = array<i64: 16, 144>}, {transform_indices = @transform_8, window_bounds = array<i64: 1, 16, 256>}]} {
    %c0 = arith.constant 0 : index
    %c0_0 = arith.constant 0 : index
    %0 = vector.load %arg2[%c0, %c0_0] : memref<2x256xbf16, #tpu.memory_space<vmem>>, vector<2x256xbf16>
    %1 = vector.extract_strided_slice %0 {offsets = [0, 0], sizes = [1, 256], strides = [1, 1]} : vector<2x256xbf16> to vector<1x256xbf16>
    %2 = vector.extract_strided_slice %0 {offsets = [1, 0], sizes = [1, 256], strides = [1, 1]} : vector<2x256xbf16> to vector<1x256xbf16>
    %cst = arith.constant 0.000000e+00 : bf16
    %3 = vector.broadcast %cst : bf16 to vector<16x128xbf16>
    %c0_1 = arith.constant 0 : index
    %c0_2 = arith.constant 0 : index
    %4 = vector.load %arg10[%c0_1, %c0_2] : memref<16x512xbf16, #tpu.memory_space<vmem>>, vector<16x128xbf16>
    tpu.vector_store %arg10[%c0_1, %c0_2], %3 {strides = array<i32>} : memref<16x512xbf16, #tpu.memory_space<vmem>>, vector<16x128xbf16>,
    %cst_3 = arith.constant 0.000000e+00 : bf16
    %5 = vector.broadcast %cst_3 : bf16 to vector<16x128xbf16>
    %c0_4 = arith.constant 0 : index
    %c384 = arith.constant 384 : index
    %6 = vector.load %arg10[%c0_4, %c384] : memref<16x512xbf16, #tpu.memory_space<vmem>>, vector<16x128xbf16>
    tpu.vector_store %arg10[%c0_4, %c384], %5 {strides = array<i32>} : memref<16x512xbf16, #tpu.memory_space<vmem>>, vector<16x128xbf16>,
    %c0_5 = arith.constant 0 : index
    %c0_6 = arith.constant 0 : index
    %7 = vector.load %arg3[%c0_5, %c0_6] : memref<16x1xf32, #tpu.memory_space<vmem>>, vector<16x1xf32>
    %c0_7 = arith.constant 0 : index
    %c0_8 = arith.constant 0 : index
    %8 = vector.load %arg4[%c0_7, %c0_8] : memref<16x1xf32, #tpu.memory_space<vmem>>, vector<16x1xf32>
    %c0_9 = arith.constant 0 : index
    %c0_10 = arith.constant 0 : index
    %9 = vector.load %arg6[%c0_9, %c0_10] : memref<16x1xf32, #tpu.memory_space<vmem>>, vector<16x1xf32>
    %c0_11 = arith.constant 0 : index
    %c0_12 = arith.constant 0 : index
    %10 = vector.load %arg7[%c0_11, %c0_12] : memref<16x1xf32, #tpu.memory_space<vmem>>, vector<16x1xf32>
    %c0_13 = arith.constant 0 : index
    %c0_14 = arith.constant 0 : index
    %c0_15 = arith.constant 0 : index
    %11 = vector.load %arg1[%c0_13, %c0_14, %c0_15] : memref<1x16x256xf32, #tpu.memory_space<vmem>>, vector<1x16x256xf32>
    %12 = vector.shape_cast %11 : vector<1x16x256xf32> to vector<16x256xf32>
    %cst_16 = arith.constant dense<0.000000e+00> : vector<16xf32>
    %13 = vector.multi_reduction <add>, %12, %cst_16 [1] : vector<16x256xf32> to vector<16xf32>
    %14 = vector.shape_cast %13 : vector<16xf32> to vector<16x1xf32>
    %cst_17 = arith.constant dense<0.000000e+00> : vector<16xf32>
    %15 = vector.multi_reduction <add>, %14, %cst_17 [1] : vector<16x1xf32> to vector<16xf32>
    %16 = vector.shape_cast %15 : vector<16xf32> to vector<16x1xf32>
    %cst_18 = arith.constant 2.560000e+02 : f32
    %17 = vector.broadcast %cst_18 : f32 to vector<16x1xf32>
    %18 = arith.divf %16, %17 : vector<16x1xf32>
    %19 = vector.broadcast %18 : vector<16x1xf32> to vector<16x256xf32>
    %20 = arith.subf %12, %19 : vector<16x256xf32>
    %21 = arith.mulf %20, %20 : vector<16x256xf32>
    %cst_19 = arith.constant dense<0.000000e+00> : vector<16xf32>
    %22 = vector.multi_reduction <add>, %21, %cst_19 [1] : vector<16x256xf32> to vector<16xf32>
    %23 = vector.shape_cast %22 : vector<16xf32> to vector<16x1xf32>
    %cst_20 = arith.constant dense<0.000000e+00> : vector<16xf32>
    %24 = vector.multi_reduction <add>, %23, %cst_20 [1] : vector<16x1xf32> to vector<16xf32>
    %25 = vector.shape_cast %24 : vector<16xf32> to vector<16x1xf32>
    %cst_21 = arith.constant 2.560000e+02 : f32
    %26 = vector.broadcast %cst_21 : f32 to vector<16x1xf32>
    %27 = arith.divf %25, %26 : vector<16x1xf32>
    %cst_22 = arith.constant 9.99999974E-6 : f32
    %28 = vector.broadcast %cst_22 : f32 to vector<16x1xf32>
    %29 = arith.addf %27, %28 : vector<16x1xf32>
    %30 = math.rsqrt %29 : vector<16x1xf32>
    %31 = arith.mulf %30, %7 : vector<16x1xf32>
    %32 = vector.broadcast %31 : vector<16x1xf32> to vector<16x256xf32>
    %33 = arith.mulf %20, %32 : vector<16x256xf32>
    %34 = vector.broadcast %8 : vector<16x1xf32> to vector<16x256xf32>
    %35 = arith.addf %33, %34 : vector<16x256xf32>
    %cst_23 = arith.constant 0.000000e+00 : f32
    %36 = vector.broadcast %cst_23 : f32 to vector<16x256xf32>
    %37 = arith.maximumf %35, %36 : vector<16x256xf32>
    %38 = arith.truncf %37 : vector<16x256xf32> to vector<16x256xbf16>
    %c0_24 = arith.constant 0 : index
    %c128 = arith.constant 128 : index
    %39 = vector.load %arg10[%c0_24, %c128] : memref<16x512xbf16, #tpu.memory_space<vmem>>, vector<16x256xbf16>
    tpu.vector_store %arg10[%c0_24, %c128], %38 {strides = array<i32>} : memref<16x512xbf16, #tpu.memory_space<vmem>>, vector<16x256xbf16>,
    %c0_25 = arith.constant 0 : index
    %c111 = arith.constant 111 : index
    %40 = vector.load %arg10[%c0_25, %c111] : memref<16x512xbf16, #tpu.memory_space<vmem>>, vector<16x256xbf16>
    %41 = vector.broadcast %1 : vector<1x256xbf16> to vector<16x256xbf16>
    %42 = arith.mulf %40, %41 : vector<16x256xbf16>
    %c0_26 = arith.constant 0 : index
    %c0_27 = arith.constant 0 : index
    %43 = vector.load %arg11[%c0_26, %c0_27] : memref<144x256xbf16, #tpu.memory_space<vmem>>, vector<16x256xbf16>
    tpu.vector_store %arg11[%c0_26, %c0_27], %42 {strides = array<i32>} : memref<144x256xbf16, #tpu.memory_space<vmem>>, vector<16x256xbf16>,
    %c0_28 = arith.constant 0 : index
    %c112 = arith.constant 112 : index
    %44 = vector.load %arg10[%c0_28, %c112] : memref<16x512xbf16, #tpu.memory_space<vmem>>, vector<16x256xbf16>
    %c16 = arith.constant 16 : index
    %c0_29 = arith.constant 0 : index
    %45 = vector.load %arg11[%c16, %c0_29] : memref<144x256xbf16, #tpu.memory_space<vmem>>, vector<16x256xbf16>
    tpu.vector_store %arg11[%c16, %c0_29], %44 {strides = array<i32>} : memref<144x256xbf16, #tpu.memory_space<vmem>>, vector<16x256xbf16>,
    %c0_30 = arith.constant 0 : index
    %c113 = arith.constant 113 : index
    %46 = vector.load %arg10[%c0_30, %c113] : memref<16x512xbf16, #tpu.memory_space<vmem>>, vector<16x256xbf16>
    %47 = vector.broadcast %2 : vector<1x256xbf16> to vector<16x256xbf16>
    %48 = arith.mulf %46, %47 : vector<16x256xbf16>
    %c32 = arith.constant 32 : index
    %c0_31 = arith.constant 0 : index
    %49 = vector.load %arg11[%c32, %c0_31] : memref<144x256xbf16, #tpu.memory_space<vmem>>, vector<16x256xbf16>
    tpu.vector_store %arg11[%c32, %c0_31], %48 {strides = array<i32>} : memref<144x256xbf16, #tpu.memory_space<vmem>>, vector<16x256xbf16>,
    %c0_32 = arith.constant 0 : index
    %c127 = arith.constant 127 : index
    %50 = vector.load %arg10[%c0_32, %c127] : memref<16x512xbf16, #tpu.memory_space<vmem>>, vector<16x256xbf16>
    %51 = vector.broadcast %1 : vector<1x256xbf16> to vector<16x256xbf16>
    %52 = arith.mulf %50, %51 : vector<16x256xbf16>
    %c48 = arith.constant 48 : index
    %c0_33 = arith.constant 0 : index
    %53 = vector.load %arg11[%c48, %c0_33] : memref<144x256xbf16, #tpu.memory_space<vmem>>, vector<16x256xbf16>
    tpu.vector_store %arg11[%c48, %c0_33], %52 {strides = array<i32>} : memref<144x256xbf16, #tpu.memory_space<vmem>>, vector<16x256xbf16>,
    %c0_34 = arith.constant 0 : index
    %c128_35 = arith.constant 128 : index
    %54 = vector.load %arg10[%c0_34, %c128_35] : memref<16x512xbf16, #tpu.memory_space<vmem>>, vector<16x256xbf16>
    %c64 = arith.constant 64 : index
    %c0_36 = arith.constant 0 : index
    %55 = vector.load %arg11[%c64, %c0_36] : memref<144x256xbf16, #tpu.memory_space<vmem>>, vector<16x256xbf16>
    tpu.vector_store %arg11[%c64, %c0_36], %54 {strides = array<i32>} : memref<144x256xbf16, #tpu.memory_space<vmem>>, vector<16x256xbf16>,
    %c0_37 = arith.constant 0 : index
    %c129 = arith.constant 129 : index
    %56 = vector.load %arg10[%c0_37, %c129] : memref<16x512xbf16, #tpu.memory_space<vmem>>, vector<16x256xbf16>
    %57 = vector.broadcast %2 : vector<1x256xbf16> to vector<16x256xbf16>
    %58 = arith.mulf %56, %57 : vector<16x256xbf16>
    %c80 = arith.constant 80 : index
    %c0_38 = arith.constant 0 : index
    %59 = vector.load %arg11[%c80, %c0_38] : memref<144x256xbf16, #tpu.memory_space<vmem>>, vector<16x256xbf16>
    tpu.vector_store %arg11[%c80, %c0_38], %58 {strides = array<i32>} : memref<144x256xbf16, #tpu.memory_space<vmem>>, vector<16x256xbf16>,
    %c0_39 = arith.constant 0 : index
    %c143 = arith.constant 143 : index
    %60 = vector.load %arg10[%c0_39, %c143] : memref<16x512xbf16, #tpu.memory_space<vmem>>, vector<16x256xbf16>
    %61 = vector.broadcast %1 : vector<1x256xbf16> to vector<16x256xbf16>
    %62 = arith.mulf %60, %61 : vector<16x256xbf16>
    %c96 = arith.constant 96 : index
    %c0_40 = arith.constant 0 : index
    %63 = vector.load %arg11[%c96, %c0_40] : memref<144x256xbf16, #tpu.memory_space<vmem>>, vector<16x256xbf16>
    tpu.vector_store %arg11[%c96, %c0_40], %62 {strides = array<i32>} : memref<144x256xbf16, #tpu.memory_space<vmem>>, vector<16x256xbf16>,
    %c0_41 = arith.constant 0 : index
    %c144 = arith.constant 144 : index
    %64 = vector.load %arg10[%c0_41, %c144] : memref<16x512xbf16, #tpu.memory_space<vmem>>, vector<16x256xbf16>
    %c112_42 = arith.constant 112 : index
    %c0_43 = arith.constant 0 : index
    %65 = vector.load %arg11[%c112_42, %c0_43] : memref<144x256xbf16, #tpu.memory_space<vmem>>, vector<16x256xbf16>
    tpu.vector_store %arg11[%c112_42, %c0_43], %64 {strides = array<i32>} : memref<144x256xbf16, #tpu.memory_space<vmem>>, vector<16x256xbf16>,
    %c0_44 = arith.constant 0 : index
    %c145 = arith.constant 145 : index
    %66 = vector.load %arg10[%c0_44, %c145] : memref<16x512xbf16, #tpu.memory_space<vmem>>, vector<16x256xbf16>
    %67 = vector.broadcast %2 : vector<1x256xbf16> to vector<16x256xbf16>
    %68 = arith.mulf %66, %67 : vector<16x256xbf16>
    %c128_45 = arith.constant 128 : index
    %c0_46 = arith.constant 0 : index
    %69 = vector.load %arg11[%c128_45, %c0_46] : memref<144x256xbf16, #tpu.memory_space<vmem>>, vector<16x256xbf16>
    tpu.vector_store %arg11[%c128_45, %c0_46], %68 {strides = array<i32>} : memref<144x256xbf16, #tpu.memory_space<vmem>>, vector<16x256xbf16>,
    %c0_47 = arith.constant 0 : index
    %c0_48 = arith.constant 0 : index
    %70 = vector.load %arg5[%c0_47, %c0_48] : memref<16x144xbf16, #tpu.memory_space<vmem>>, vector<16x144xbf16>
    %c0_49 = arith.constant 0 : index
    %c0_50 = arith.constant 0 : index
    %71 = vector.load %arg11[%c0_49, %c0_50] : memref<144x256xbf16, #tpu.memory_space<vmem>>, vector<144x256xbf16>
    %cst_51 = arith.constant dense<0.000000e+00> : vector<16x256xf32>
    %72 = tpu.matmul %70, %71, %cst_51 {dimension_numbers = #tpu.dot_dimension_numbers<[1], [0], [0], [1], [0, 0, 1, 1], [], []>} : vector<16x144xbf16>, vector<144x256xbf16>, vector<16x256xf32> -> vector<16x256xf32>
    %cst_52 = arith.constant dense<0.000000e+00> : vector<16xf32>
    %73 = vector.multi_reduction <add>, %72, %cst_52 [1] : vector<16x256xf32> to vector<16xf32>
    %74 = vector.shape_cast %73 : vector<16xf32> to vector<16x1xf32>
    %cst_53 = arith.constant dense<0.000000e+00> : vector<16xf32>
    %75 = vector.multi_reduction <add>, %74, %cst_53 [1] : vector<16x1xf32> to vector<16xf32>
    %76 = vector.shape_cast %75 : vector<16xf32> to vector<16x1xf32>
    %cst_54 = arith.constant 2.560000e+02 : f32
    %77 = vector.broadcast %cst_54 : f32 to vector<16x1xf32>
    %78 = arith.divf %76, %77 : vector<16x1xf32>
    %79 = vector.broadcast %78 : vector<16x1xf32> to vector<16x256xf32>
    %80 = arith.subf %72, %79 : vector<16x256xf32>
    %81 = arith.mulf %80, %80 : vector<16x256xf32>
    %cst_55 = arith.constant dense<0.000000e+00> : vector<16xf32>
    %82 = vector.multi_reduction <add>, %81, %cst_55 [1] : vector<16x256xf32> to vector<16xf32>
    %83 = vector.shape_cast %82 : vector<16xf32> to vector<16x1xf32>
    %cst_56 = arith.constant dense<0.000000e+00> : vector<16xf32>
    %84 = vector.multi_reduction <add>, %83, %cst_56 [1] : vector<16x1xf32> to vector<16xf32>
    %85 = vector.shape_cast %84 : vector<16xf32> to vector<16x1xf32>
    %cst_57 = arith.constant 2.560000e+02 : f32
    %86 = vector.broadcast %cst_57 : f32 to vector<16x1xf32>
    %87 = arith.divf %85, %86 : vector<16x1xf32>
    %cst_58 = arith.constant 9.99999974E-6 : f32
    %88 = vector.broadcast %cst_58 : f32 to vector<16x1xf32>
    %89 = arith.addf %87, %88 : vector<16x1xf32>
    %90 = math.rsqrt %89 : vector<16x1xf32>
    %91 = arith.mulf %90, %9 : vector<16x1xf32>
    %92 = vector.broadcast %91 : vector<16x1xf32> to vector<16x256xf32>
    %93 = arith.mulf %80, %92 : vector<16x256xf32>
    %94 = vector.broadcast %10 : vector<16x1xf32> to vector<16x256xf32>
    %95 = arith.addf %93, %94 : vector<16x256xf32>
    %cst_59 = arith.constant 0.000000e+00 : f32
    %96 = vector.broadcast %cst_59 : f32 to vector<16x256xf32>
    %97 = arith.maximumf %95, %96 : vector<16x256xf32>
    %98 = arith.truncf %97 : vector<16x256xf32> to vector<16x256xbf16>
    %c0_60 = arith.constant 0 : index
    %c128_61 = arith.constant 128 : index
    %99 = vector.load %arg10[%c0_60, %c128_61] : memref<16x512xbf16, #tpu.memory_space<vmem>>, vector<16x256xbf16>
    tpu.vector_store %arg10[%c0_60, %c128_61], %98 {strides = array<i32>} : memref<16x512xbf16, #tpu.memory_space<vmem>>, vector<16x256xbf16>,
    %c0_62 = arith.constant 0 : index
    %c111_63 = arith.constant 111 : index
    %100 = vector.load %arg10[%c0_62, %c111_63] : memref<16x512xbf16, #tpu.memory_space<vmem>>, vector<16x256xbf16>
    %101 = vector.broadcast %1 : vector<1x256xbf16> to vector<16x256xbf16>
    %102 = arith.mulf %100, %101 : vector<16x256xbf16>
    %c0_64 = arith.constant 0 : index
    %c0_65 = arith.constant 0 : index
    %103 = vector.load %arg11[%c0_64, %c0_65] : memref<144x256xbf16, #tpu.memory_space<vmem>>, vector<16x256xbf16>
    tpu.vector_store %arg11[%c0_64, %c0_65], %102 {strides = array<i32>} : memref<144x256xbf16, #tpu.memory_space<vmem>>, vector<16x256xbf16>,
    %c0_66 = arith.constant 0 : index
    %c112_67 = arith.constant 112 : index
    %104 = vector.load %arg10[%c0_66, %c112_67] : memref<16x512xbf16, #tpu.memory_space<vmem>>, vector<16x256xbf16>
    %c16_68 = arith.constant 16 : index
    %c0_69 = arith.constant 0 : index
    %105 = vector.load %arg11[%c16_68, %c0_69] : memref<144x256xbf16, #tpu.memory_space<vmem>>, vector<16x256xbf16>
    tpu.vector_store %arg11[%c16_68, %c0_69], %104 {strides = array<i32>} : memref<144x256xbf16, #tpu.memory_space<vmem>>, vector<16x256xbf16>,
    %c0_70 = arith.constant 0 : index
    %c113_71 = arith.constant 113 : index
    %106 = vector.load %arg10[%c0_70, %c113_71] : memref<16x512xbf16, #tpu.memory_space<vmem>>, vector<16x256xbf16>
    %107 = vector.broadcast %2 : vector<1x256xbf16> to vector<16x256xbf16>
    %108 = arith.mulf %106, %107 : vector<16x256xbf16>
    %c32_72 = arith.constant 32 : index
    %c0_73 = arith.constant 0 : index
    %109 = vector.load %arg11[%c32_72, %c0_73] : memref<144x256xbf16, #tpu.memory_space<vmem>>, vector<16x256xbf16>
    tpu.vector_store %arg11[%c32_72, %c0_73], %108 {strides = array<i32>} : memref<144x256xbf16, #tpu.memory_space<vmem>>, vector<16x256xbf16>,
    %c0_74 = arith.constant 0 : index
    %c127_75 = arith.constant 127 : index
    %110 = vector.load %arg10[%c0_74, %c127_75] : memref<16x512xbf16, #tpu.memory_space<vmem>>, vector<16x256xbf16>
    %111 = vector.broadcast %1 : vector<1x256xbf16> to vector<16x256xbf16>
    %112 = arith.mulf %110, %111 : vector<16x256xbf16>
    %c48_76 = arith.constant 48 : index
    %c0_77 = arith.constant 0 : index
    %113 = vector.load %arg11[%c48_76, %c0_77] : memref<144x256xbf16, #tpu.memory_space<vmem>>, vector<16x256xbf16>
    tpu.vector_store %arg11[%c48_76, %c0_77], %112 {strides = array<i32>} : memref<144x256xbf16, #tpu.memory_space<vmem>>, vector<16x256xbf16>,
    %c0_78 = arith.constant 0 : index
    %c128_79 = arith.constant 128 : index
    %114 = vector.load %arg10[%c0_78, %c128_79] : memref<16x512xbf16, #tpu.memory_space<vmem>>, vector<16x256xbf16>
    %c64_80 = arith.constant 64 : index
    %c0_81 = arith.constant 0 : index
    %115 = vector.load %arg11[%c64_80, %c0_81] : memref<144x256xbf16, #tpu.memory_space<vmem>>, vector<16x256xbf16>
    tpu.vector_store %arg11[%c64_80, %c0_81], %114 {strides = array<i32>} : memref<144x256xbf16, #tpu.memory_space<vmem>>, vector<16x256xbf16>,
    %c0_82 = arith.constant 0 : index
    %c129_83 = arith.constant 129 : index
    %116 = vector.load %arg10[%c0_82, %c129_83] : memref<16x512xbf16, #tpu.memory_space<vmem>>, vector<16x256xbf16>
    %117 = vector.broadcast %2 : vector<1x256xbf16> to vector<16x256xbf16>
    %118 = arith.mulf %116, %117 : vector<16x256xbf16>
    %c80_84 = arith.constant 80 : index
    %c0_85 = arith.constant 0 : index
    %119 = vector.load %arg11[%c80_84, %c0_85] : memref<144x256xbf16, #tpu.memory_space<vmem>>, vector<16x256xbf16>
    tpu.vector_store %arg11[%c80_84, %c0_85], %118 {strides = array<i32>} : memref<144x256xbf16, #tpu.memory_space<vmem>>, vector<16x256xbf16>,
    %c0_86 = arith.constant 0 : index
    %c143_87 = arith.constant 143 : index
    %120 = vector.load %arg10[%c0_86, %c143_87] : memref<16x512xbf16, #tpu.memory_space<vmem>>, vector<16x256xbf16>
    %121 = vector.broadcast %1 : vector<1x256xbf16> to vector<16x256xbf16>
    %122 = arith.mulf %120, %121 : vector<16x256xbf16>
    %c96_88 = arith.constant 96 : index
    %c0_89 = arith.constant 0 : index
    %123 = vector.load %arg11[%c96_88, %c0_89] : memref<144x256xbf16, #tpu.memory_space<vmem>>, vector<16x256xbf16>
    tpu.vector_store %arg11[%c96_88, %c0_89], %122 {strides = array<i32>} : memref<144x256xbf16, #tpu.memory_space<vmem>>, vector<16x256xbf16>,
    %c0_90 = arith.constant 0 : index
    %c144_91 = arith.constant 144 : index
    %124 = vector.load %arg10[%c0_90, %c144_91] : memref<16x512xbf16, #tpu.memory_space<vmem>>, vector<16x256xbf16>
    %c112_92 = arith.constant 112 : index
    %c0_93 = arith.constant 0 : index
    %125 = vector.load %arg11[%c112_92, %c0_93] : memref<144x256xbf16, #tpu.memory_space<vmem>>, vector<16x256xbf16>
    tpu.vector_store %arg11[%c112_92, %c0_93], %124 {strides = array<i32>} : memref<144x256xbf16, #tpu.memory_space<vmem>>, vector<16x256xbf16>,
    %c0_94 = arith.constant 0 : index
    %c145_95 = arith.constant 145 : index
    %126 = vector.load %arg10[%c0_94, %c145_95] : memref<16x512xbf16, #tpu.memory_space<vmem>>, vector<16x256xbf16>
    %127 = vector.broadcast %2 : vector<1x256xbf16> to vector<16x256xbf16>
    %128 = arith.mulf %126, %127 : vector<16x256xbf16>
    %c128_96 = arith.constant 128 : index
    %c0_97 = arith.constant 0 : index
    %129 = vector.load %arg11[%c128_96, %c0_97] : memref<144x256xbf16, #tpu.memory_space<vmem>>, vector<16x256xbf16>
    tpu.vector_store %arg11[%c128_96, %c0_97], %128 {strides = array<i32>} : memref<144x256xbf16, #tpu.memory_space<vmem>>, vector<16x256xbf16>,
    %c0_98 = arith.constant 0 : index
    %c0_99 = arith.constant 0 : index
    %130 = vector.load %arg8[%c0_98, %c0_99] : memref<16x144xbf16, #tpu.memory_space<vmem>>, vector<16x144xbf16>
    %c0_100 = arith.constant 0 : index
    %c0_101 = arith.constant 0 : index
    %131 = vector.load %arg11[%c0_100, %c0_101] : memref<144x256xbf16, #tpu.memory_space<vmem>>, vector<144x256xbf16>
    %cst_102 = arith.constant dense<0.000000e+00> : vector<16x256xf32>
    %132 = tpu.matmul %130, %131, %cst_102 {dimension_numbers = #tpu.dot_dimension_numbers<[1], [0], [0], [1], [0, 0, 1, 1], [], []>} : vector<16x144xbf16>, vector<144x256xbf16>, vector<16x256xf32> -> vector<16x256xf32>
    %c0_103 = arith.constant 0 : index
    %c0_104 = arith.constant 0 : index
    %c0_105 = arith.constant 0 : index
    %133 = vector.load %arg1[%c0_103, %c0_104, %c0_105] : memref<1x16x256xf32, #tpu.memory_space<vmem>>, vector<1x16x256xf32>
    %134 = vector.shape_cast %133 : vector<1x16x256xf32> to vector<16x256xf32>
    %135 = arith.addf %132, %134 : vector<16x256xf32>
    %c0_106 = arith.constant 0 : index
    %c0_107 = arith.constant 0 : index
    %c0_108 = arith.constant 0 : index
    %136 = vector.load %arg9[%c0_106, %c0_107, %c0_108] : memref<1x16x256xf32, #tpu.memory_space<vmem>>, vector<1x16x256xf32>
    %137 = vector.shape_cast %136 : vector<1x16x256xf32> to vector<16x256xf32>
    %138 = vector.shape_cast %135 : vector<16x256xf32> to vector<1x16x256xf32>
    tpu.vector_store %arg9[%c0_106, %c0_107, %c0_108], %138 {strides = array<i32>} : memref<1x16x256xf32, #tpu.memory_space<vmem>>, vector<1x16x256xf32>,
    return
  }
  func.func @transform_0(%arg0: i32) -> (i32, i32, i32) {
    %c0_i32 = arith.constant 0 : i32
    %c0_i32_0 = arith.constant 0 : i32
    %c0_i32_1 = arith.constant 0 : i32
    return %arg0, %c0_i32, %c0_i32_0 : i32, i32, i32
  }
  func.func @transform_1(%arg0: i32) -> (i32, i32) {
    %c0_i32 = arith.constant 0 : i32
    %c0_i32_0 = arith.constant 0 : i32
    %c0_i32_1 = arith.constant 0 : i32
    return %c0_i32, %c0_i32_0 : i32, i32
  }
  func.func @transform_2(%arg0: i32) -> (i32, i32) {
    %c0_i32 = arith.constant 0 : i32
    %c0_i32_0 = arith.constant 0 : i32
    %c0_i32_1 = arith.constant 0 : i32
    return %c0_i32, %c0_i32_0 : i32, i32
  }
  func.func @transform_3(%arg0: i32) -> (i32, i32) {
    %c0_i32 = arith.constant 0 : i32
    %c0_i32_0 = arith.constant 0 : i32
    %c0_i32_1 = arith.constant 0 : i32
    return %c0_i32, %c0_i32_0 : i32, i32
  }
  func.func @transform_4(%arg0: i32) -> (i32, i32) {
    %c0_i32 = arith.constant 0 : i32
    %c0_i32_0 = arith.constant 0 : i32
    %c0_i32_1 = arith.constant 0 : i32
    return %c0_i32, %c0_i32_0 : i32, i32
  }
  func.func @transform_5(%arg0: i32) -> (i32, i32) {
    %c0_i32 = arith.constant 0 : i32
    %c0_i32_0 = arith.constant 0 : i32
    %c0_i32_1 = arith.constant 0 : i32
    return %c0_i32, %c0_i32_0 : i32, i32
  }
  func.func @transform_6(%arg0: i32) -> (i32, i32) {
    %c0_i32 = arith.constant 0 : i32
    %c0_i32_0 = arith.constant 0 : i32
    %c0_i32_1 = arith.constant 0 : i32
    return %c0_i32, %c0_i32_0 : i32, i32
  }
  func.func @transform_7(%arg0: i32) -> (i32, i32) {
    %c0_i32 = arith.constant 0 : i32
    %c0_i32_0 = arith.constant 0 : i32
    %c0_i32_1 = arith.constant 0 : i32
    return %c0_i32, %c0_i32_0 : i32, i32
  }
  func.func @transform_8(%arg0: i32) -> (i32, i32, i32) {
    %c0_i32 = arith.constant 0 : i32
    %c0_i32_0 = arith.constant 0 : i32
    %c0_i32_1 = arith.constant 0 : i32
    return %arg0, %c0_i32, %c0_i32_0 : i32, i32, i32
  }
}

</mosaic_0001>

<llo_original>
// kernel: forward_impl.1
$region0: #{forward_impl.1}
  #allocation0 [shape = 'u32[]', space=smem, size = 0x4, offset = 0x4, fixed_abs, tag = 'smem constant byte address 0x4 - core index']
  #allocation1 [shape = 'u32[144,128]{1,0:T(1,128)}', space=vmem, size = 0x12000, scoped, tag = 'internal scratch']
  #allocation2 [shape = 'bf16[16,512]{1,0:T(16,128)(2,1)}', space=vmem, size = 0x4000, scoped, tag = 'scratch operand']
  #allocation3 [shape = 'bf16[144,256]{1,0:T(16,128)(2,1)}', space=vmem, size = 0x12000, scoped, tag = 'scratch operand']
  %s0 = inlined_call_operand.vmem [shape: f32[2,16,256], index: 0, kind: input, shape index: {}]
  %s1 = inlined_call_operand.vmem [shape: bf16[2,256], index: 1, kind: input, shape index: {}]
  %s2 = inlined_call_operand.vmem [shape: f32[16,1], index: 2, kind: input, shape index: {}]
  %s3 = inlined_call_operand.vmem [shape: f32[16,1], index: 3, kind: input, shape index: {}]
  %s4 = inlined_call_operand.vmem [shape: bf16[16,144], index: 4, kind: input, shape index: {}]
  %s5 = inlined_call_operand.vmem [shape: f32[16,1], index: 5, kind: input, shape index: {}]
  %s6 = inlined_call_operand.vmem [shape: f32[16,1], index: 6, kind: input, shape index: {}]
  %s7 = inlined_call_operand.vmem [shape: bf16[16,144], index: 7, kind: input, shape index: {}]
  %s8 = inlined_call_operand.vmem [shape: f32[2,16,256], index: 8, kind: output, shape index: {}]
  %s9 = sld [smem:[#allocation0]]
  $region65: #{forward_impl.1} parent=0
    _
  %s11 = ssub.s32 1, %s9
  %s12 = scalar_select 0, %s11, %s9
  loop: start=0, step=1, limit=4
  $region2: #{forward_impl.1} parent=0 // loop_pre_header
    _
  $region3: #{forward_impl.1} parent=0 // loop_header
    %s14 = sphi 0, %s18
    %p15 = scmp.ge.s32.totalorder %s14, 4
    %s24 = sphi 0, %s26
    %s27 = sphi 0, %s24
    %s28 = sphi 0, %s27
    %s44 = sphi 0, %s28
    %s48 = sphi 0, %s48
    %s50 = sphi 0, %s48
    %s51 = sphi 0, %s50
    %s65 = sphi 0, %s51
    %s69 = sphi 0, %s69
    %s71 = sphi 0, %s69
    %s72 = sphi 0, %s71
    %s86 = sphi 0, %s72
    %s90 = sphi 0, %s90
    %s92 = sphi 0, %s90
    %s93 = sphi 0, %s92
    %s107 = sphi 0, %s93
    %s111 = sphi 0, %s111
    %s113 = sphi 0, %s111
    %s114 = sphi 0, %s113
    %s128 = sphi 0, %s114
    %s132 = sphi 0, %s132
    %s134 = sphi 0, %s132
    %s135 = sphi 0, %s134
    %s149 = sphi 0, %s135
    %s153 = sphi 0, %s153
    %s155 = sphi 0, %s153
    %s156 = sphi 0, %s155
    %s170 = sphi 0, %s156
    %s174 = sphi 0, %s174
    %s176 = sphi 0, %s174
    %s177 = sphi 0, %s176
    %s191 = sphi 0, %s177
    %s197 = sphi 0, %s199
    %s200 = sphi 0, %s197
    %s201 = sphi 0, %s200
    %s217 = sphi 0, %s201
  $region4: #{forward_impl.1} parent=0 // loop_header_branch
    %17 = sbr.rel (%p15) target = $region8
  $region5: #{forward_impl.1} parent=0 // loop_body
    %s19 = ssub.s32 %s14, 1
    %s20 = ssub.s32 %s14, 2
    %s21 = sadd.s32 %s14, 1
    %s22 = ssub.s32 %s14, %s21
    %p23 = scmp.eq.s32.totalorder %s22, 0
    %s25 = sadd.s32 %s24, 1
    %s26 = scalar_select %p23, %s24, %s25
    %p29 = pneg %p23
    %p30 = scmp.eq.s32.totalorder %s14, 1
    %p31 = por %p29, %p30
    %p32 = scmp.ne.s32.totalorder %s24, %s27
    %p33 = scmp.eq.s32.totalorder %s14, 0
    %p34 = por %p32, %p33
    %p35 = scmp.ne.s32.totalorder %s24, %s27
    %p36 = scmp.eq.s32.totalorder %s19, 1
    %p37 = por %p35, %p36
    %p38 = scmp.ne.s32.totalorder %s27, %s28
    %p39 = scmp.eq.s32.totalorder %s19, 0
    %p40 = por %p38, %p39
    %p41 = scmp.ne.s32.totalorder %s27, %s28
    %p42 = scmp.eq.s32.totalorder %s20, 1
    %p43 = por %p41, %p42
    %p45 = scmp.ne.s32.totalorder %s28, %s44
    %p46 = scmp.eq.s32.totalorder %s20, 0
    %p47 = por %p45, %p46
    %s49 = sadd.s32 %s48, 1
    %p52 = scmp.eq.s32.totalorder %s14, 1
    %p53 = scmp.ne.s32.totalorder %s48, %s50
    %p54 = scmp.eq.s32.totalorder %s14, 0
    %p55 = por %p53, %p54
    %p56 = scmp.ne.s32.totalorder %s48, %s50
    %p57 = scmp.eq.s32.totalorder %s19, 1
    %p58 = por %p56, %p57
    %p59 = scmp.ne.s32.totalorder %s50, %s51
    %p60 = scmp.eq.s32.totalorder %s19, 0
    %p61 = por %p59, %p60
    %p62 = scmp.ne.s32.totalorder %s50, %s51
    %p63 = scmp.eq.s32.totalorder %s20, 1
    %p64 = por %p62, %p63
    %p66 = scmp.ne.s32.totalorder %s51, %s65
    %p67 = scmp.eq.s32.totalorder %s20, 0
    %p68 = por %p66, %p67
    %s70 = sadd.s32 %s69, 1
    %p73 = scmp.eq.s32.totalorder %s14, 1
    %p74 = scmp.ne.s32.totalorder %s69, %s71
    %p75 = scmp.eq.s32.totalorder %s14, 0
    %p76 = por %p74, %p75
    %p77 = scmp.ne.s32.totalorder %s69, %s71
    %p78 = scmp.eq.s32.totalorder %s19, 1
    %p79 = por %p77, %p78
    %p80 = scmp.ne.s32.totalorder %s71, %s72
    %p81 = scmp.eq.s32.totalorder %s19, 0
    %p82 = por %p80, %p81
    %p83 = scmp.ne.s32.totalorder %s71, %s72
    %p84 = scmp.eq.s32.totalorder %s20, 1
    %p85 = por %p83, %p84
    %p87 = scmp.ne.s32.totalorder %s72, %s86
    %p88 = scmp.eq.s32.totalorder %s20, 0
    %p89 = por %p87, %p88
    %s91 = sadd.s32 %s90, 1
    %p94 = scmp.eq.s32.totalorder %s14, 1
    %p95 = scmp.ne.s32.totalorder %s90, %s92
    %p96 = scmp.eq.s32.totalorder %s14, 0
    %p97 = por %p95, %p96
    %p98 = scmp.ne.s32.totalorder %s90, %s92
    %p99 = scmp.eq.s32.totalorder %s19, 1
    %p100 = por %p98, %p99
    %p101 = scmp.ne.s32.totalorder %s92, %s93
    %p102 = scmp.eq.s32.totalorder %s19, 0
    %p103 = por %p101, %p102
    %p104 = scmp.ne.s32.totalorder %s92, %s93
    %p105 = scmp.eq.s32.totalorder %s20, 1
    %p106 = por %p104, %p105
    %p108 = scmp.ne.s32.totalorder %s93, %s107
    %p109 = scmp.eq.s32.totalorder %s20, 0
    %p110 = por %p108, %p109
    %s112 = sadd.s32 %s111, 1
    %p115 = scmp.eq.s32.totalorder %s14, 1
    %p116 = scmp.ne.s32.totalorder %s111, %s113
    %p117 = scmp.eq.s32.totalorder %s14, 0
    %p118 = por %p116, %p117
    %p119 = scmp.ne.s32.totalorder %s111, %s113
    %p120 = scmp.eq.s32.totalorder %s19, 1
    %p121 = por %p119, %p120
    %p122 = scmp.ne.s32.totalorder %s113, %s114
    %p123 = scmp.eq.s32.totalorder %s19, 0
    %p124 = por %p122, %p123
    %p125 = scmp.ne.s32.totalorder %s113, %s114
    %p126 = scmp.eq.s32.totalorder %s20, 1
    %p127 = por %p125, %p126
    %p129 = scmp.ne.s32.totalorder %s114, %s128
    %p130 = scmp.eq.s32.totalorder %s20, 0
    %p131 = por %p129, %p130
    %s133 = sadd.s32 %s132, 1
    %p136 = scmp.eq.s32.totalorder %s14, 1
    %p137 = scmp.ne.s32.totalorder %s132, %s134
    %p138 = scmp.eq.s32.totalorder %s14, 0
    %p139 = por %p137, %p138
    %p140 = scmp.ne.s32.totalorder %s132, %s134
    %p141 = scmp.eq.s32.totalorder %s19, 1
    %p142 = por %p140, %p141
    %p143 = scmp.ne.s32.totalorder %s134, %s135
    %p144 = scmp.eq.s32.totalorder %s19, 0
    %p145 = por %p143, %p144
    %p146 = scmp.ne.s32.totalorder %s134, %s135
    %p147 = scmp.eq.s32.totalorder %s20, 1
    %p148 = por %p146, %p147
    %p150 = scmp.ne.s32.totalorder %s135, %s149
    %p151 = scmp.eq.s32.totalorder %s20, 0
    %p152 = por %p150, %p151
    %s154 = sadd.s32 %s153, 1
    %p157 = scmp.eq.s32.totalorder %s14, 1
    %p158 = scmp.ne.s32.totalorder %s153, %s155
    %p159 = scmp.eq.s32.totalorder %s14, 0
    %p160 = por %p158, %p159
    %p161 = scmp.ne.s32.totalorder %s153, %s155
    %p162 = scmp.eq.s32.totalorder %s19, 1
    %p163 = por %p161, %p162
    %p164 = scmp.ne.s32.totalorder %s155, %s156
    %p165 = scmp.eq.s32.totalorder %s19, 0
    %p166 = por %p164, %p165
    %p167 = scmp.ne.s32.totalorder %s155, %s156
    %p168 = scmp.eq.s32.totalorder %s20, 1
    %p169 = por %p167, %p168
    %p171 = scmp.ne.s32.totalorder %s156, %s170
    %p172 = scmp.eq.s32.totalorder %s20, 0
    %p173 = por %p171, %p172
    %s175 = sadd.s32 %s174, 1
    %p178 = scmp.eq.s32.totalorder %s14, 1
    %p179 = scmp.ne.s32.totalorder %s174, %s176
    %p180 = scmp.eq.s32.totalorder %s14, 0
    %p181 = por %p179, %p180
    %p182 = scmp.ne.s32.totalorder %s174, %s176
    %p183 = scmp.eq.s32.totalorder %s19, 1
    %p184 = por %p182, %p183
    %p185 = scmp.ne.s32.totalorder %s176, %s177
    %p186 = scmp.eq.s32.totalorder %s19, 0
    %p187 = por %p185, %p186
    %p188 = scmp.ne.s32.totalorder %s176, %s177
    %p189 = scmp.eq.s32.totalorder %s20, 1
    %p190 = por %p188, %p189
    %p192 = scmp.ne.s32.totalorder %s177, %s191
    %p193 = scmp.eq.s32.totalorder %s20, 0
    %p194 = por %p192, %p193
    %s195 = ssub.s32 %s14, %s21
    %p196 = scmp.eq.s32.totalorder %s195, 0
    %s198 = sadd.s32 %s197, 1
    %s199 = scalar_select %p196, %s197, %s198
    %p202 = pneg %p196
    %p203 = scmp.eq.s32.totalorder %s14, 1
    %p204 = por %p202, %p203
    %p205 = scmp.ne.s32.totalorder %s197, %s200
    %p206 = scmp.eq.s32.totalorder %s14, 0
    %p207 = por %p205, %p206
    %p208 = scmp.ne.s32.totalorder %s197, %s200
    %p209 = scmp.eq.s32.totalorder %s19, 1
    %p210 = por %p208, %p209
    %p211 = scmp.ne.s32.totalorder %s200, %s201
    %p212 = scmp.eq.s32.totalorder %s19, 0
    %p213 = por %p211, %p212
    %p214 = scmp.ne.s32.totalorder %s200, %s201
    %p215 = scmp.eq.s32.totalorder %s20, 1
    %p216 = por %p214, %p215
    %p218 = scmp.ne.s32.totalorder %s201, %s217
    %p219 = scmp.eq.s32.totalorder %s20, 0
    %p220 = por %p218, %p219
    %p221 = scmp.le.s32.totalorder 1, %s14
    %p222 = scmp.lt.s32.totalorder %s14, 3
    %p223 = pnand %p221, %p222
    %p224 = pneg %p223
    // Predicated region
    $region9: #{forward_impl.1} parent=5 // pred_check
      _
    $region10: #{forward_impl.1} parent=5 // pred_check_branch
      %226 = sbr.rel (%p223) target = $region12
    $region11: #{forward_impl.1} parent=5 // pred_region
      %s227 = ssub.s32 %s14, 1
      // Predicated region
      $region13: #{forward_impl.1} parent=11 // pred_check
        %p228 = pneg %p61
      $region14: #{forward_impl.1} parent=11 // pred_check_branch
        %230 = sbr.rel (%p228) target = $region16
      $region15: #{forward_impl.1} parent=11 // pred_region
        _
      $region16: #{forward_impl.1} parent=11 // pred_fallthru
        _
      // Predicated region
      $region17: #{forward_impl.1} parent=11 // pred_check
        %p231 = pneg %p82
      $region18: #{forward_impl.1} parent=11 // pred_check_branch
        %233 = sbr.rel (%p231) target = $region20
      $region19: #{forward_impl.1} parent=11 // pred_region
        _
      $region20: #{forward_impl.1} parent=11 // pred_fallthru
        _
      // Predicated region
      $region21: #{forward_impl.1} parent=11 // pred_check
        %p234 = pneg %p103
      $region22: #{forward_impl.1} parent=11 // pred_check_branch
        %236 = sbr.rel (%p234) target = $region24
      $region23: #{forward_impl.1} parent=11 // pred_region
        _
      $region24: #{forward_impl.1} parent=11 // pred_fallthru
        _
      // Predicated region
      $region25: #{forward_impl.1} parent=11 // pred_check
        %p237 = pneg %p124
      $region26: #{forward_impl.1} parent=11 // pred_check_branch
        %239 = sbr.rel (%p237) target = $region28
      $region27: #{forward_impl.1} parent=11 // pred_region
        _
      $region28: #{forward_impl.1} parent=11 // pred_fallthru
        _
      // Predicated region
      $region29: #{forward_impl.1} parent=11 // pred_check
        %p240 = pneg %p145
      $region30: #{forward_impl.1} parent=11 // pred_check_branch
        %242 = sbr.rel (%p240) target = $region32
      $region31: #{forward_impl.1} parent=11 // pred_region
        _
      $region32: #{forward_impl.1} parent=11 // pred_fallthru
        _
      // Predicated region
      $region33: #{forward_impl.1} parent=11 // pred_check
        %p243 = pneg %p166
      $region34: #{forward_impl.1} parent=11 // pred_check_branch
        %245 = sbr.rel (%p243) target = $region36
      $region35: #{forward_impl.1} parent=11 // pred_region
        _
      $region36: #{forward_impl.1} parent=11 // pred_fallthru
        _
      // Predicated region
      $region37: #{forward_impl.1} parent=11 // pred_check
        %p246 = pneg %p187
      $region38: #{forward_impl.1} parent=11 // pred_check_branch
        %248 = sbr.rel (%p246) target = $region40
      $region39: #{forward_impl.1} parent=11 // pred_region
        _
      $region40: #{forward_impl.1} parent=11 // pred_fallthru
        _
    $region12: #{forward_impl.1} parent=5 // pred_fallthru
      _
    %p249 = scmp.lt.s32.totalorder %s14, 2
    // Predicated region
    $region41: #{forward_impl.1} parent=5 // pred_check
      %p250 = pneg %p249
    $region42: #{forward_impl.1} parent=5 // pred_check_branch
      %252 = sbr.rel (%p250) target = $region44
    $region43: #{forward_impl.1} parent=5 // pred_region
      // Predicated region
      $region45: #{forward_impl.1} parent=43 // pred_check
        %p253 = pneg %p34
      $region46: #{forward_impl.1} parent=43 // pred_check_branch
        %255 = sbr.rel (%p253) target = $region48
      $region47: #{forward_impl.1} parent=43 // pred_region
        %p256 = scmp.lt.s32.totalorder %s14, 1
        %s257 = scalar_select %p256, %s14, 1
        %s258 = smul.addr %s257, 4
        %s259 = smul.addr %s258, 8
        %s260 = scalar_lea.vmem %s0, %s259
      $region48: #{forward_impl.1} parent=43 // pred_fallthru
        _
    $region44: #{forward_impl.1} parent=5 // pred_fallthru
      _
    %p261 = scmp.le.s32.totalorder 1, %s14
    %p262 = scmp.lt.s32.totalorder %s14, 3
    %p263 = pnand %p261, %p262
    %p264 = pneg %p263
    // Predicated region
    $region49: #{forward_impl.1} parent=5 // pred_check
      _
    $region50: #{forward_impl.1} parent=5 // pred_check_branch
      %266 = sbr.rel (%p263) target = $region52
    $region51: #{forward_impl.1} parent=5 // pred_region
      %s267 = ssub.s32 %s14, 1
      %p268 = scmp.lt.s32.totalorder %s19, 1
      %s269 = scalar_select %p268, %s19, 1
      %s270 = smul.addr %s269, 4
      %s271 = smul.addr %s270, 8
      %s272 = scalar_lea.vmem %s0, %s271
      %p273 = pneg %p40
      %p274 = pneg %p37
      %p275 = pneg %p61
      %p276 = pneg %p58
      %p277 = pneg %p82
      %p278 = pneg %p79
      %p279 = pneg %p103
      %p280 = pneg %p100
      %p281 = pneg %p124
      %p282 = pneg %p121
      %p283 = pneg %p145
      %p284 = pneg %p142
      %p285 = pneg %p166
      %p286 = pneg %p163
      %p287 = pneg %p187
      %p288 = pneg %p184
      %p289 = pneg %p213
      %p290 = pneg %p210
      %p291 = scmp.lt.s32.totalorder %s19, 1
      %s292 = scalar_select %p291, %s19, 1
      %s293 = smul.addr %s292, 4
      %s294 = smul.addr %s293, 8
      %s295 = scalar_lea.vmem %s8, %s294
      %p296 = scmp.lt.s32.totalorder %s19, 1
      %s297 = scalar_select %p296, %s19, 1
      %s298 = smul.addr %s297, 4
      %s299 = smul.addr %s298, 8
      %s300 = scalar_lea.vmem %s0, %s299
      %p301 = scmp.lt.s32.totalorder %s19, 1
      %s302 = scalar_select %p301, %s19, 1
      %s303 = smul.addr %s302, 4
      %s304 = smul.addr %s303, 8
      %s305 = scalar_lea.vmem %s8, %s304
      %v307 = vld [vmem:[%s1] sm:$0x3]
      %308 = vst [vmem:[#allocation2] sm:$0xff] 0
      %309 = vst [vmem:[#allocation2 + $0x18] sm:$0xff] 0
      %v310 = vld [vmem:[%s2] sm:$0xff]
      %v311 = vld [vmem:[%s2 + $0x8] sm:$0xff]
      %v312 = vld [vmem:[%s3] sm:$0xff]
      %v313 = vld [vmem:[%s3 + $0x8] sm:$0xff]
      %v314 = vld [vmem:[%s5] sm:$0xff]
      %v315 = vld [vmem:[%s5 + $0x8] sm:$0xff]
      %v316 = vld [vmem:[%s6] sm:$0xff]
      %v317 = vld [vmem:[%s6 + $0x8] sm:$0xff]
      %v318 = vld [vmem:[%s300] sm:$0xff]
      %v319 = vld [vmem:[%s300 + $0x8] sm:$0xff]
      %v320 = vld [vmem:[%s300 + $0x10] sm:$0xff]
      %v321 = vld [vmem:[%s300 + $0x18] sm:$0xff]
      %v322 = vadd.f32 %v318, %v319
      %323 = vadd.xlane.f32.xlu0 %v322
      %v324 = vpop.xlane.xlu0 %323
      %v325 = vadd.f32 %v320, %v321
      %326 = vadd.xlane.f32.xlu0 %v325
      %v327 = vpop.xlane.xlu0 %326
      %v328 = vadd.f32 %v324, 0.0
      %v329 = vadd.f32 %v327, 0.0
      %v330 = vrcp.pop 256.0
      %v331 = vmul.f32 %v328, %v330
      %v332 = vmul.f32 %v329, %v330
      %v333 = vsub.f32 %v318, %v331
      %v334 = vsub.f32 %v319, %v331
      %v335 = vsub.f32 %v320, %v332
      %v336 = vsub.f32 %v321, %v332
      %v337 = vmul.f32 %v333, %v333
      %v338 = vmul.f32 %v334, %v334
      %v339 = vmul.f32 %v335, %v335
      %v340 = vmul.f32 %v336, %v336
      %v341 = vadd.f32 %v337, %v338
      %342 = vadd.xlane.f32.xlu0 %v341
      %v343 = vpop.xlane.xlu0 %342
      %v344 = vadd.f32 %v339, %v340
      %345 = vadd.xlane.f32.xlu0 %v344
      %v346 = vpop.xlane.xlu0 %345
      %v347 = vadd.f32 %v343, 0.0
      %v348 = vadd.f32 %v346, 0.0
      %v349 = vmul.f32 %v347, %v330
      %v350 = vmul.f32 %v348, %v330
      %v351 = vadd.f32 %v349, 1e-05
      %v352 = vadd.f32 %v350, 1e-05
      %v353 = vrsqrt.pop %v351
      %v354 = vrsqrt.pop %v352
      %v355 = vmul.f32 %v353, %v310
      %v356 = vmul.f32 %v354, %v311
      %358 = vset.pattern.permute.xlu0 0
      %359 = vperm.xlu0 %358, %v355
      %v360 = vpop.permute.xlu0 %359
      %363 = vset.pattern.permute.xlu0 0
      %364 = vperm.xlu0 %363, %v356
      %v365 = vpop.permute.xlu0 %364
      %v367 = vmul.f32 %v333, %v360
      %v368 = vmul.f32 %v334, %v360
      %v369 = vmul.f32 %v335, %v365
      %v370 = vmul.f32 %v336, %v365
      %372 = vset.pattern.permute.xlu0 0
      %373 = vperm.xlu0 %372, %v312
      %v374 = vpop.permute.xlu0 %373
      %377 = vset.pattern.permute.xlu0 0
      %378 = vperm.xlu0 %377, %v313
      %v379 = vpop.permute.xlu0 %378
      %v381 = vadd.f32 %v367, %v374
      %v382 = vadd.f32 %v368, %v374
      %v383 = vadd.f32 %v369, %v379
      %v384 = vadd.f32 %v370, %v379
      %v385 = vmax.f32 %v381, 0.0
      %v386 = vmax.f32 %v382, 0.0
      %v387 = vmax.f32 %v383, 0.0
      %v388 = vmax.f32 %v384, 0.0
      %v389 = vpack.c.bf16 %v387, %v385
      %v390 = vpack.c.bf16 %v388, %v386
      %391 = vst [vmem:[#allocation2 + $0x8] sm:$0xff] %v389
      %392 = vst [vmem:[#allocation2 + $0x10] sm:$0xff] %v390
      %v393 = vld [vmem:[#allocation2] sm:$0xff]
      %v394 = vld [vmem:[#allocation2 + $0x8] sm:$0xff]
      %v395 = vld [vmem:[#allocation2 + $0x10] sm:$0xff]
      %v398 = vunpack.c.l.s4 1966171168
      %v399 = vunpack.c.0.s8 %v398
      %v400 = vlaneseq
      %v401 = vshrl.u32 %v400, 7
      %v402 = vsub.s32 %v399, %v401
      %v403 = vrot.slane %v307, %v402
      %v404 = vcombine.high %v403, %v403
      %v406 = vunpack.c.l.s4 1966171168
      %v407 = vunpack.c.0.s8 %v406
      %v408 = vlaneseq
      %v409 = vshrl.u32 %v408, 7
      %v410 = vsub.s32 %v407, %v409
      %v411 = vrot.slane %v403, %v410
      %v413 = vunpack.c.l.s4 1966171168
      %v414 = vunpack.c.0.s8 %v413
      %v415 = vlaneseq
      %v416 = vshrl.u32 %v415, 7
      %v417 = vsub.s32 %v414, %v416
      %v418 = vrot.slane %v404, %v417
      %v420 = vpack.i.b16 %v411, %v411
      %v422 = vlaneseq
      %v423 = vshrl.u32 %v422, 7
      %v424 = vsub.s32 0, %v423
      %v425 = vrot.slane %v420, %v424
      %v427 = vpack.i.b16 %v418, %v418
      %v429 = vlaneseq
      %v430 = vshrl.u32 %v429, 7
      %v431 = vsub.s32 0, %v430
      %v432 = vrot.slane %v427, %v431
      %435 = vrot.lane.b32.xlu0 %v425, 111
      %v436 = vpop.permute.xlu0 %435
      %437 = vrot.lane.b32.xlu0 %v432, 111
      %v438 = vpop.permute.xlu0 %437
      %vm439 = vcmask 908288
      %v440 = vsel %vm439, %v436, %v438
      %v444 = vmul.bf16 %v393, %v436
      %v445 = vmul.bf16 %v394, %v440
      %v446 = vmul.bf16 %v395, %v438
      %450 = vrot.lane.b32.xlu0 %v444, 17
      %v451 = vpop.permute.xlu0 %450
      %452 = vrot.lane.b32.xlu0 %v445, 17
      %v453 = vpop.permute.xlu0 %452
      %454 = vrot.lane.b32.xlu0 %v446, 17
      %v455 = vpop.permute.xlu0 %454
      %vm456 = vcmask 138240
      %v457 = vsel %vm456, %v451, %v453
      %v458 = vsel %vm456, %v453, %v455
      %461 = vst [vmem:[#allocation3] sm:$0xff] %v457
      %462 = vst [vmem:[#allocation3 + $0x8] sm:$0xff] %v458
      %v463 = vld [vmem:[#allocation2] sm:$0xff]
      %v464 = vld [vmem:[#allocation2 + $0x8] sm:$0xff]
      %v465 = vld [vmem:[#allocation2 + $0x10] sm:$0xff]
      %469 = vrot.lane.b32.xlu0 %v463, 16
      %v470 = vpop.permute.xlu0 %469
      %471 = vrot.lane.b32.xlu0 %v464, 16
      %v472 = vpop.permute.xlu0 %471
      %473 = vrot.lane.b32.xlu0 %v465, 16
      %v474 = vpop.permute.xlu0 %473
      %vm475 = vcmask 130048
      %v476 = vsel %vm475, %v470, %v472
      %v477 = vsel %vm475, %v472, %v474
      %480 = vst [vmem:[#allocation3 + $0x10] sm:$0xff] %v476
      %481 = vst [vmem:[#allocation3 + $0x18] sm:$0xff] %v477
      %v482 = vld [vmem:[#allocation2] sm:$0xff]
      %v483 = vld [vmem:[#allocation2 + $0x8] sm:$0xff]
      %v484 = vld [vmem:[#allocation2 + $0x10] sm:$0xff]
      %v485 = vshrl.u32 %v411, 16
      %v486 = vpack.i.b16 %v485, %v485
      %v488 = vlaneseq
      %v489 = vshrl.u32 %v488, 7
      %v490 = vsub.s32 0, %v489
      %v491 = vrot.slane %v486, %v490
      %v492 = vshrl.u32 %v418, 16
      %v493 = vpack.i.b16 %v492, %v492
      %v495 = vlaneseq
      %v496 = vshrl.u32 %v495, 7
      %v497 = vsub.s32 0, %v496
      %v498 = vrot.slane %v493, %v497
      %501 = vrot.lane.b32.xlu0 %v491, 113
      %v502 = vpop.permute.xlu0 %501
      %503 = vrot.lane.b32.xlu0 %v498, 113
      %v504 = vpop.permute.xlu0 %503
      %vm505 = vcmask 924672
      %v506 = vsel %vm505, %v502, %v504
      %v510 = vmul.bf16 %v482, %v502
      %v511 = vmul.bf16 %v483, %v506
      %v512 = vmul.bf16 %v484, %v504
      %516 = vrot.lane.b32.xlu0 %v510, 15
      %v517 = vpop.permute.xlu0 %516
      %518 = vrot.lane.b32.xlu0 %v511, 15
      %v519 = vpop.permute.xlu0 %518
      %520 = vrot.lane.b32.xlu0 %v512, 15
      %v521 = vpop.permute.xlu0 %520
      %vm522 = vcmask 121856
      %v523 = vsel %vm522, %v517, %v519
      %v524 = vsel %vm522, %v519, %v521
      %527 = vst [vmem:[#allocation3 + $0x20] sm:$0xff] %v523
      %528 = vst [vmem:[#allocation3 + $0x28] sm:$0xff] %v524
      %v529 = vld [vmem:[#allocation2] sm:$0xff]
      %v530 = vld [vmem:[#allocation2 + $0x8] sm:$0xff]
      %v531 = vld [vmem:[#allocation2 + $0x10] sm:$0xff]
      %532 = vrot.lane.b32.xlu0 %v425, 127
      %v533 = vpop.permute.xlu0 %532
      %534 = vrot.lane.b32.xlu0 %v432, 127
      %v535 = vpop.permute.xlu0 %534
      %vm536 = vcmask 1039360
      %v537 = vsel %vm536, %v533, %v535
      %v541 = vmul.bf16 %v529, %v533
      %v542 = vmul.bf16 %v530, %v537
      %v543 = vmul.bf16 %v531, %v535
      %547 = vrot.lane.b32.xlu0 %v541, 1
      %v548 = vpop.permute.xlu0 %547
      %549 = vrot.lane.b32.xlu0 %v542, 1
      %v550 = vpop.permute.xlu0 %549
      %551 = vrot.lane.b32.xlu0 %v543, 1
      %v552 = vpop.permute.xlu0 %551
      %vm553 = vcmask 7168
      %v554 = vsel %vm553, %v548, %v550
      %v555 = vsel %vm553, %v550, %v552
      %558 = vst [vmem:[#allocation3 + $0x30] sm:$0xff] %v554
      %559 = vst [vmem:[#allocation3 + $0x38] sm:$0xff] %v555
      %v560 = vld [vmem:[#allocation2 + $0x8] sm:$0xff]
      %v561 = vld [vmem:[#allocation2 + $0x10] sm:$0xff]
      %562 = vst [vmem:[#allocation3 + $0x40] sm:$0xff] %v560
      %563 = vst [vmem:[#allocation3 + $0x48] sm:$0xff] %v561
      %v564 = vld [vmem:[#allocation2 + $0x8] sm:$0xff]
      %v565 = vld [vmem:[#allocation2 + $0x10] sm:$0xff]
      %v566 = vld [vmem:[#allocation2 + $0x18] sm:$0xff]
      %567 = vrot.lane.b32.xlu0 %v491, 1
      %v568 = vpop.permute.xlu0 %567
      %569 = vrot.lane.b32.xlu0 %v498, 1
      %v570 = vpop.permute.xlu0 %569
      %v571 = vsel %vm553, %v568, %v570
      %v575 = vmul.bf16 %v564, %v568
      %v576 = vmul.bf16 %v565, %v571
      %v577 = vmul.bf16 %v566, %v570
      %581 = vrot.lane.b32.xlu0 %v575, 127
      %v582 = vpop.permute.xlu0 %581
      %583 = vrot.lane.b32.xlu0 %v576, 127
      %v584 = vpop.permute.xlu0 %583
      %585 = vrot.lane.b32.xlu0 %v577, 127
      %v586 = vpop.permute.xlu0 %585
      %v587 = vsel %vm536, %v582, %v584
      %v588 = vsel %vm536, %v584, %v586
      %591 = vst [vmem:[#allocation3 + $0x50] sm:$0xff] %v587
      %592 = vst [vmem:[#allocation3 + $0x58] sm:$0xff] %v588
      %v593 = vld [vmem:[#allocation2 + $0x8] sm:$0xff]
      %v594 = vld [vmem:[#allocation2 + $0x10] sm:$0xff]
      %v595 = vld [vmem:[#allocation2 + $0x18] sm:$0xff]
      %596 = vrot.lane.b32.xlu0 %v425, 15
      %v597 = vpop.permute.xlu0 %596
      %598 = vrot.lane.b32.xlu0 %v432, 15
      %v599 = vpop.permute.xlu0 %598
      %v600 = vsel %vm522, %v597, %v599
      %v604 = vmul.bf16 %v593, %v597
      %v605 = vmul.bf16 %v594, %v600
      %v606 = vmul.bf16 %v595, %v599
      %610 = vrot.lane.b32.xlu0 %v604, 113
      %v611 = vpop.permute.xlu0 %610
      %612 = vrot.lane.b32.xlu0 %v605, 113
      %v613 = vpop.permute.xlu0 %612
      %614 = vrot.lane.b32.xlu0 %v606, 113
      %v615 = vpop.permute.xlu0 %614
      %v616 = vsel %vm505, %v611, %v613
      %v617 = vsel %vm505, %v613, %v615
      %620 = vst [vmem:[#allocation3 + $0x60] sm:$0xff] %v616
      %621 = vst [vmem:[#allocation3 + $0x68] sm:$0xff] %v617
      %v622 = vld [vmem:[#allocation2 + $0x8] sm:$0xff]
      %v623 = vld [vmem:[#allocation2 + $0x10] sm:$0xff]
      %v624 = vld [vmem:[#allocation2 + $0x18] sm:$0xff]
      %628 = vrot.lane.b32.xlu0 %v622, 112
      %v629 = vpop.permute.xlu0 %628
      %630 = vrot.lane.b32.xlu0 %v623, 112
      %v631 = vpop.permute.xlu0 %630
      %632 = vrot.lane.b32.xlu0 %v624, 112
      %v633 = vpop.permute.xlu0 %632
      %vm634 = vcmask 916480
      %v635 = vsel %vm634, %v629, %v631
      %v636 = vsel %vm634, %v631, %v633
      %639 = vst [vmem:[#allocation3 + $0x70] sm:$0xff] %v635
      %640 = vst [vmem:[#allocation3 + $0x78] sm:$0xff] %v636
      %v641 = vld [vmem:[#allocation2 + $0x8] sm:$0xff]
      %v642 = vld [vmem:[#allocation2 + $0x10] sm:$0xff]
      %v643 = vld [vmem:[#allocation2 + $0x18] sm:$0xff]
      %644 = vrot.lane.b32.xlu0 %v491, 17
      %v645 = vpop.permute.xlu0 %644
      %646 = vrot.lane.b32.xlu0 %v498, 17
      %v647 = vpop.permute.xlu0 %646
      %v648 = vsel %vm456, %v645, %v647
      %v652 = vmul.bf16 %v641, %v645
      %v653 = vmul.bf16 %v642, %v648
      %v654 = vmul.bf16 %v643, %v647
      %658 = vrot.lane.b32.xlu0 %v652, 111
      %v659 = vpop.permute.xlu0 %658
      %660 = vrot.lane.b32.xlu0 %v653, 111
      %v661 = vpop.permute.xlu0 %660
      %662 = vrot.lane.b32.xlu0 %v654, 111
      %v663 = vpop.permute.xlu0 %662
      %v664 = vsel %vm439, %v659, %v661
      %v665 = vsel %vm439, %v661, %v663
      %668 = vst [vmem:[#allocation3 + $0x80] sm:$0xff] %v664
      %669 = vst [vmem:[#allocation3 + $0x88] sm:$0xff] %v665
      %v670 = vld [vmem:[%s4] sm:$0xff]
      %v671 = vld [vmem:[%s4 + $0x8] sm:$0xff]
      %v672 = vld [vmem:[#allocation3] sm:$0xff]
      %v673 = vld [vmem:[#allocation3 + $0x8] sm:$0xff]
      %v674 = vld [vmem:[#allocation3 + $0x10] sm:$0xff]
      %v675 = vld [vmem:[#allocation3 + $0x18] sm:$0xff]
      %v676 = vld [vmem:[#allocation3 + $0x20] sm:$0xff]
      %v677 = vld [vmem:[#allocation3 + $0x28] sm:$0xff]
      %v678 = vld [vmem:[#allocation3 + $0x30] sm:$0xff]
      %v679 = vld [vmem:[#allocation3 + $0x38] sm:$0xff]
      %v680 = vld [vmem:[#allocation3 + $0x40] sm:$0xff]
      %v681 = vld [vmem:[#allocation3 + $0x48] sm:$0xff]
      %v682 = vld [vmem:[#allocation3 + $0x50] sm:$0xff]
      %v683 = vld [vmem:[#allocation3 + $0x58] sm:$0xff]
      %v684 = vld [vmem:[#allocation3 + $0x60] sm:$0xff]
      %v685 = vld [vmem:[#allocation3 + $0x68] sm:$0xff]
      %v686 = vld [vmem:[#allocation3 + $0x70] sm:$0xff]
      %v687 = vld [vmem:[#allocation3 + $0x78] sm:$0xff]
      %v688 = vld [vmem:[#allocation3 + $0x80] sm:$0xff]
      %v689 = vld [vmem:[#allocation3 + $0x88] sm:$0xff]
      %v692 = vunpack.c.l.b16 %v670
      %v693 = vunpack.c.h.b16 %v670
      %v694 = vunpack.c.l.b16 %v671
      %v695 = vunpack.c.h.b16 %v671
      %v696 = vpack.c.b16 %v694, %v692
      %v697 = vpack.c.b16 %v695, %v693
      %vm699 = vcmask 130048
      %v701 = vsel %vm699, %v697, 0
      %703 = vmatprep.subr.bf16.mxu0 %v673
      %704 = vmatpush1.bf16.msra.mxu0 %v672
      %705 = vmatprep.subr.bf16.mxu0 %v675
      %706 = vmatpush1.bf16.msra.mxu0 %v674
      %707 = vmatprep.subr.bf16.mxu0 %v677
      %708 = vmatpush1.bf16.msra.mxu0 %v676
      %709 = vmatprep.subr.bf16.mxu0 %v679
      %710 = vmatpush1.bf16.msra.mxu0 %v678
      %711 = vmatprep.subr.bf16.mxu0 %v681
      %712 = vmatpush1.bf16.msra.mxu0 %v680
      %713 = vmatprep.subr.bf16.mxu0 %v683
      %714 = vmatpush1.bf16.msra.mxu0 %v682
      %715 = vmatprep.subr.bf16.mxu0 %v685
      %716 = vmatpush1.bf16.msra.mxu0 %v684
      %717 = vmatprep.subr.bf16.mxu0 %v687
      %718 = vmatpush1.bf16.msra.mxu0 %v686
      %719 = vmatprep.subr.bf16.mxu0 %v689
      %720 = vmatpush1.bf16.msra.mxu0 %v688
      %721 = vmatprep.subr.bf16.mxu0 0
      %722 = vmatpush1.bf16.msra.mxu0 0
      %723 = vmatprep.subr.bf16.mxu0 0
      %724 = vmatpush1.bf16.msra.mxu0 0
      %725 = vmatprep.subr.bf16.mxu0 0
      %726 = vmatpush1.bf16.msra.mxu0 0
      %727 = vmatprep.subr.bf16.mxu0 0
      %728 = vmatpush1.bf16.msra.mxu0 0
      %729 = vmatprep.subr.bf16.mxu0 0
      %730 = vmatpush1.bf16.msra.mxu0 0
      %731 = vmatprep.subr.bf16.mxu0 0
      %732 = vmatpush1.bf16.msra.mxu0 0
      %733 = vmatprep.subr.bf16.mxu0 0
      %734 = vmatpush1.bf16.msra.mxu0 0
      %735 = vmatprep.mubr.bf16.mxu0 %v701
      %736 = vmatmul.mubr.bf16.gmra.mrb[0].mxu0 %v696
      %v737 = vpop.f32.mrb[0].mxu0
      %v738 = vadd.f32 0.0, %v737
      %v739 = vpop.f32.mrb[0].mxu0
      %v740 = vadd.f32 0.0, %v739
      %v741 = vpop.f32.mrb[0].mxu0
      %v742 = vadd.f32 0.0, %v741
      %v743 = vpop.f32.mrb[0].mxu0
      %v744 = vadd.f32 0.0, %v743
      %745 = vdwg.mxu0
      %v746 = vadd.f32 %v738, %v740
      %747 = vadd.xlane.f32.xlu0 %v746
      %v748 = vpop.xlane.xlu0 %747
      %v749 = vadd.f32 %v742, %v744
      %750 = vadd.xlane.f32.xlu0 %v749
      %v751 = vpop.xlane.xlu0 %750
      %v752 = vadd.f32 %v748, 0.0
      %v753 = vadd.f32 %v751, 0.0
      %v754 = vmul.f32 %v752, %v330
      %v755 = vmul.f32 %v753, %v330
      %v756 = vsub.f32 %v738, %v754
      %v757 = vsub.f32 %v740, %v754
      %v758 = vsub.f32 %v742, %v755
      %v759 = vsub.f32 %v744, %v755
      %v760 = vmul.f32 %v756, %v756
      %v761 = vmul.f32 %v757, %v757
      %v762 = vmul.f32 %v758, %v758
      %v763 = vmul.f32 %v759, %v759
      %v764 = vadd.f32 %v760, %v761
      %765 = vadd.xlane.f32.xlu0 %v764
      %v766 = vpop.xlane.xlu0 %765
      %v767 = vadd.f32 %v762, %v763
      %768 = vadd.xlane.f32.xlu0 %v767
      %v769 = vpop.xlane.xlu0 %768
      %v770 = vadd.f32 %v766, 0.0
      %v771 = vadd.f32 %v769, 0.0
      %v772 = vmul.f32 %v770, %v330
      %v773 = vmul.f32 %v771, %v330
      %v774 = vadd.f32 %v772, 1e-05
      %v775 = vadd.f32 %v773, 1e-05
      %v776 = vrsqrt.pop %v774
      %v777 = vrsqrt.pop %v775
      %v778 = vmul.f32 %v776, %v314
      %v779 = vmul.f32 %v777, %v315
      %781 = vset.pattern.permute.xlu0 0
      %782 = vperm.xlu0 %781, %v778
      %v783 = vpop.permute.xlu0 %782
      %786 = vset.pattern.permute.xlu0 0
      %787 = vperm.xlu0 %786, %v779
      %v788 = vpop.permute.xlu0 %787
      %v790 = vmul.f32 %v756, %v783
      %v791 = vmul.f32 %v757, %v783
      %v792 = vmul.f32 %v758, %v788
      %v793 = vmul.f32 %v759, %v788
      %795 = vset.pattern.permute.xlu0 0
      %796 = vperm.xlu0 %795, %v316
      %v797 = vpop.permute.xlu0 %796
      %800 = vset.pattern.permute.xlu0 0
      %801 = vperm.xlu0 %800, %v317
      %v802 = vpop.permute.xlu0 %801
      %v804 = vadd.f32 %v790, %v797
      %v805 = vadd.f32 %v791, %v797
      %v806 = vadd.f32 %v792, %v802
      %v807 = vadd.f32 %v793, %v802
      %v808 = vmax.f32 %v804, 0.0
      %v809 = vmax.f32 %v805, 0.0
      %v810 = vmax.f32 %v806, 0.0
      %v811 = vmax.f32 %v807, 0.0
      %v812 = vpack.c.bf16 %v810, %v808
      %v813 = vpack.c.bf16 %v811, %v809
      %814 = vst [vmem:[#allocation2 + $0x8] sm:$0xff] %v812
      %815 = vst [vmem:[#allocation2 + $0x10] sm:$0xff] %v813
      %v816 = vld [vmem:[#allocation2] sm:$0xff]
      %v817 = vld [vmem:[#allocation2 + $0x8] sm:$0xff]
      %v818 = vld [vmem:[#allocation2 + $0x10] sm:$0xff]
      %v819 = vmul.bf16 %v816, %v436
      %v820 = vmul.bf16 %v817, %v440
      %v821 = vmul.bf16 %v818, %v438
      %825 = vrot.lane.b32.xlu0 %v819, 17
      %v826 = vpop.permute.xlu0 %825
      %827 = vrot.lane.b32.xlu0 %v820, 17
      %v828 = vpop.permute.xlu0 %827
      %829 = vrot.lane.b32.xlu0 %v821, 17
      %v830 = vpop.permute.xlu0 %829
      %v831 = vsel %vm456, %v826, %v828
      %v832 = vsel %vm456, %v828, %v830
      %835 = vst [vmem:[#allocation3] sm:$0xff] %v831
      %836 = vst [vmem:[#allocation3 + $0x8] sm:$0xff] %v832
      %v837 = vld [vmem:[#allocation2] sm:$0xff]
      %v838 = vld [vmem:[#allocation2 + $0x8] sm:$0xff]
      %v839 = vld [vmem:[#allocation2 + $0x10] sm:$0xff]
      %843 = vrot.lane.b32.xlu0 %v837, 16
      %v844 = vpop.permute.xlu0 %843
      %845 = vrot.lane.b32.xlu0 %v838, 16
      %v846 = vpop.permute.xlu0 %845
      %847 = vrot.lane.b32.xlu0 %v839, 16
      %v848 = vpop.permute.xlu0 %847
      %v849 = vsel %vm475, %v844, %v846
      %v850 = vsel %vm475, %v846, %v848
      %853 = vst [vmem:[#allocation3 + $0x10] sm:$0xff] %v849
      %854 = vst [vmem:[#allocation3 + $0x18] sm:$0xff] %v850
      %v855 = vld [vmem:[#allocation2] sm:$0xff]
      %v856 = vld [vmem:[#allocation2 + $0x8] sm:$0xff]
      %v857 = vld [vmem:[#allocation2 + $0x10] sm:$0xff]
      %v858 = vmul.bf16 %v855, %v502
      %v859 = vmul.bf16 %v856, %v506
      %v860 = vmul.bf16 %v857, %v504
      %864 = vrot.lane.b32.xlu0 %v858, 15
      %v865 = vpop.permute.xlu0 %864
      %866 = vrot.lane.b32.xlu0 %v859, 15
      %v867 = vpop.permute.xlu0 %866
      %868 = vrot.lane.b32.xlu0 %v860, 15
      %v869 = vpop.permute.xlu0 %868
      %v870 = vsel %vm522, %v865, %v867
      %v871 = vsel %vm522, %v867, %v869
      %874 = vst [vmem:[#allocation3 + $0x20] sm:$0xff] %v870
      %875 = vst [vmem:[#allocation3 + $0x28] sm:$0xff] %v871
      %v876 = vld [vmem:[#allocation2] sm:$0xff]
      %v877 = vld [vmem:[#allocation2 + $0x8] sm:$0xff]
      %v878 = vld [vmem:[#allocation2 + $0x10] sm:$0xff]
      %v879 = vmul.bf16 %v876, %v533
      %v880 = vmul.bf16 %v877, %v537
      %v881 = vmul.bf16 %v878, %v535
      %885 = vrot.lane.b32.xlu0 %v879, 1
      %v886 = vpop.permute.xlu0 %885
      %887 = vrot.lane.b32.xlu0 %v880, 1
      %v888 = vpop.permute.xlu0 %887
      %889 = vrot.lane.b32.xlu0 %v881, 1
      %v890 = vpop.permute.xlu0 %889
      %v891 = vsel %vm553, %v886, %v888
      %v892 = vsel %vm553, %v888, %v890
      %895 = vst [vmem:[#allocation3 + $0x30] sm:$0xff] %v891
      %896 = vst [vmem:[#allocation3 + $0x38] sm:$0xff] %v892
      %v897 = vld [vmem:[#allocation2 + $0x8] sm:$0xff]
      %v898 = vld [vmem:[#allocation2 + $0x10] sm:$0xff]
      %899 = vst [vmem:[#allocation3 + $0x40] sm:$0xff] %v897
      %900 = vst [vmem:[#allocation3 + $0x48] sm:$0xff] %v898
      %v901 = vld [vmem:[#allocation2 + $0x8] sm:$0xff]
      %v902 = vld [vmem:[#allocation2 + $0x10] sm:$0xff]
      %v903 = vld [vmem:[#allocation2 + $0x18] sm:$0xff]
      %v904 = vmul.bf16 %v901, %v568
      %v905 = vmul.bf16 %v902, %v571
      %v906 = vmul.bf16 %v903, %v570
      %910 = vrot.lane.b32.xlu0 %v904, 127
      %v911 = vpop.permute.xlu0 %910
      %912 = vrot.lane.b32.xlu0 %v905, 127
      %v913 = vpop.permute.xlu0 %912
      %914 = vrot.lane.b32.xlu0 %v906, 127
      %v915 = vpop.permute.xlu0 %914
      %v916 = vsel %vm536, %v911, %v913
      %v917 = vsel %vm536, %v913, %v915
      %920 = vst [vmem:[#allocation3 + $0x50] sm:$0xff] %v916
      %921 = vst [vmem:[#allocation3 + $0x58] sm:$0xff] %v917
      %v922 = vld [vmem:[#allocation2 + $0x8] sm:$0xff]
      %v923 = vld [vmem:[#allocation2 + $0x10] sm:$0xff]
      %v924 = vld [vmem:[#allocation2 + $0x18] sm:$0xff]
      %v925 = vmul.bf16 %v922, %v597
      %v926 = vmul.bf16 %v923, %v600
      %v927 = vmul.bf16 %v924, %v599
      %931 = vrot.lane.b32.xlu0 %v925, 113
      %v932 = vpop.permute.xlu0 %931
      %933 = vrot.lane.b32.xlu0 %v926, 113
      %v934 = vpop.permute.xlu0 %933
      %935 = vrot.lane.b32.xlu0 %v927, 113
      %v936 = vpop.permute.xlu0 %935
      %v937 = vsel %vm505, %v932, %v934
      %v938 = vsel %vm505, %v934, %v936
      %941 = vst [vmem:[#allocation3 + $0x60] sm:$0xff] %v937
      %942 = vst [vmem:[#allocation3 + $0x68] sm:$0xff] %v938
      %v943 = vld [vmem:[#allocation2 + $0x8] sm:$0xff]
      %v944 = vld [vmem:[#allocation2 + $0x10] sm:$0xff]
      %v945 = vld [vmem:[#allocation2 + $0x18] sm:$0xff]
      %949 = vrot.lane.b32.xlu0 %v943, 112
      %v950 = vpop.permute.xlu0 %949
      %951 = vrot.lane.b32.xlu0 %v944, 112
      %v952 = vpop.permute.xlu0 %951
      %953 = vrot.lane.b32.xlu0 %v945, 112
      %v954 = vpop.permute.xlu0 %953
      %v955 = vsel %vm634, %v950, %v952
      %v956 = vsel %vm634, %v952, %v954
      %959 = vst [vmem:[#allocation3 + $0x70] sm:$0xff] %v955
      %960 = vst [vmem:[#allocation3 + $0x78] sm:$0xff] %v956
      %v961 = vld [vmem:[#allocation2 + $0x8] sm:$0xff]
      %v962 = vld [vmem:[#allocation2 + $0x10] sm:$0xff]
      %v963 = vld [vmem:[#allocation2 + $0x18] sm:$0xff]
      %v964 = vmul.bf16 %v961, %v645
      %v965 = vmul.bf16 %v962, %v648
      %v966 = vmul.bf16 %v963, %v647
      %970 = vrot.lane.b32.xlu0 %v964, 111
      %v971 = vpop.permute.xlu0 %970
      %972 = vrot.lane.b32.xlu0 %v965, 111
      %v973 = vpop.permute.xlu0 %972
      %974 = vrot.lane.b32.xlu0 %v966, 111
      %v975 = vpop.permute.xlu0 %974
      %v976 = vsel %vm439, %v971, %v973
      %v977 = vsel %vm439, %v973, %v975
      %980 = vst [vmem:[#allocation3 + $0x80] sm:$0xff] %v976
      %981 = vst [vmem:[#allocation3 + $0x88] sm:$0xff] %v977
      %v982 = vld [vmem:[%s7] sm:$0xff]
      %v983 = vld [vmem:[%s7 + $0x8] sm:$0xff]
      %v984 = vld [vmem:[#allocation3] sm:$0xff]
      %v985 = vld [vmem:[#allocation3 + $0x8] sm:$0xff]
      %v986 = vld [vmem:[#allocation3 + $0x10] sm:$0xff]
      %v987 = vld [vmem:[#allocation3 + $0x18] sm:$0xff]
      %v988 = vld [vmem:[#allocation3 + $0x20] sm:$0xff]
      %v989 = vld [vmem:[#allocation3 + $0x28] sm:$0xff]
      %v990 = vld [vmem:[#allocation3 + $0x30] sm:$0xff]
      %v991 = vld [vmem:[#allocation3 + $0x38] sm:$0xff]
      %v992 = vld [vmem:[#allocation3 + $0x40] sm:$0xff]
      %v993 = vld [vmem:[#allocation3 + $0x48] sm:$0xff]
      %v994 = vld [vmem:[#allocation3 + $0x50] sm:$0xff]
      %v995 = vld [vmem:[#allocation3 + $0x58] sm:$0xff]
      %v996 = vld [vmem:[#allocation3 + $0x60] sm:$0xff]
      %v997 = vld [vmem:[#allocation3 + $0x68] sm:$0xff]
      %v998 = vld [vmem:[#allocation3 + $0x70] sm:$0xff]
      %v999 = vld [vmem:[#allocation3 + $0x78] sm:$0xff]
      %v1000 = vld [vmem:[#allocation3 + $0x80] sm:$0xff]
      %v1001 = vld [vmem:[#allocation3 + $0x88] sm:$0xff]
      %v1002 = vld [vmem:[%s300] sm:$0xff]
      %v1003 = vld [vmem:[%s300 + $0x8] sm:$0xff]
      %v1004 = vld [vmem:[%s300 + $0x10] sm:$0xff]
      %v1005 = vld [vmem:[%s300 + $0x18] sm:$0xff]
      %v1008 = vunpack.c.l.b16 %v982
      %v1009 = vunpack.c.h.b16 %v982
      %v1010 = vunpack.c.l.b16 %v983
      %v1011 = vunpack.c.h.b16 %v983
      %v1012 = vpack.c.b16 %v1010, %v1008
      %v1013 = vpack.c.b16 %v1011, %v1009
      %v1016 = vsel %vm699, %v1013, 0
      %1018 = vmatprep.subr.bf16.mxu0 %v985
      %1019 = vmatpush1.bf16.msra.mxu0 %v984
      %1020 = vmatprep.subr.bf16.mxu0 %v987
      %1021 = vmatpush1.bf16.msra.mxu0 %v986
      %1022 = vmatprep.subr.bf16.mxu0 %v989
      %1023 = vmatpush1.bf16.msra.mxu0 %v988
      %1024 = vmatprep.subr.bf16.mxu0 %v991
      %1025 = vmatpush1.bf16.msra.mxu0 %v990
      %1026 = vmatprep.subr.bf16.mxu0 %v993
      %1027 = vmatpush1.bf16.msra.mxu0 %v992
      %1028 = vmatprep.subr.bf16.mxu0 %v995
      %1029 = vmatpush1.bf16.msra.mxu0 %v994
      %1030 = vmatprep.subr.bf16.mxu0 %v997
      %1031 = vmatpush1.bf16.msra.mxu0 %v996
      %1032 = vmatprep.subr.bf16.mxu0 %v999
      %1033 = vmatpush1.bf16.msra.mxu0 %v998
      %1034 = vmatprep.subr.bf16.mxu0 %v1001
      %1035 = vmatpush1.bf16.msra.mxu0 %v1000
      %1036 = vmatprep.subr.bf16.mxu0 0
      %1037 = vmatpush1.bf16.msra.mxu0 0
      %1038 = vmatprep.subr.bf16.mxu0 0
      %1039 = vmatpush1.bf16.msra.mxu0 0
      %1040 = vmatprep.subr.bf16.mxu0 0
      %1041 = vmatpush1.bf16.msra.mxu0 0
      %1042 = vmatprep.subr.bf16.mxu0 0
      %1043 = vmatpush1.bf16.msra.mxu0 0
      %1044 = vmatprep.subr.bf16.mxu0 0
      %1045 = vmatpush1.bf16.msra.mxu0 0
      %1046 = vmatprep.subr.bf16.mxu0 0
      %1047 = vmatpush1.bf16.msra.mxu0 0
      %1048 = vmatprep.subr.bf16.mxu0 0
      %1049 = vmatpush1.bf16.msra.mxu0 0
      %1050 = vmatprep.mubr.bf16.mxu0 %v1016
      %1051 = vmatmul.mubr.bf16.gmra.mrb[0].mxu0 %v1012
      %v1052 = vpop.f32.mrb[0].mxu0
      %v1053 = vadd.f32 %v1002, %v1052
      %v1054 = vpop.f32.mrb[0].mxu0
      %v1055 = vadd.f32 %v1003, %v1054
      %v1056 = vpop.f32.mrb[0].mxu0
      %v1057 = vadd.f32 %v1004, %v1056
      %v1058 = vpop.f32.mrb[0].mxu0
      %v1059 = vadd.f32 %v1005, %v1058
      %1060 = vdwg.mxu0
      %1061 = vst [vmem:[%s305] sm:$0xff] %v1053
      %1062 = vst [vmem:[%s305 + $0x8] sm:$0xff] %v1055
      %1063 = vst [vmem:[%s305 + $0x10] sm:$0xff] %v1057
      %1064 = vst [vmem:[%s305 + $0x18] sm:$0xff] %v1059
      %p1065 = scmp.lt.s32.totalorder %s19, 1
      %s1066 = scalar_select %p1065, %s19, 1
      %s1067 = smul.addr %s1066, 4
      %s1068 = smul.addr %s1067, 8
      %s1069 = scalar_lea.vmem %s8, %s1068
      // Predicated region
      $region53: #{forward_impl.1} parent=51 // pred_check
        %p1070 = pneg %p210
      $region54: #{forward_impl.1} parent=51 // pred_check_branch
        %1072 = sbr.rel (%p1070) target = $region56
      $region55: #{forward_impl.1} parent=51 // pred_region
        _
      $region56: #{forward_impl.1} parent=51 // pred_fallthru
        _
    $region52: #{forward_impl.1} parent=5 // pred_fallthru
      _
    %p1073 = scmp.le.s32.totalorder 2, %s14
    // Predicated region
    $region57: #{forward_impl.1} parent=5 // pred_check
      %p1074 = pneg %p1073
    $region58: #{forward_impl.1} parent=5 // pred_check_branch
      %1076 = sbr.rel (%p1074) target = $region60
    $region59: #{forward_impl.1} parent=5 // pred_region
      %s1077 = ssub.s32 %s14, 2
      // Predicated region
      $region61: #{forward_impl.1} parent=59 // pred_check
        %p1078 = pneg %p216
      $region62: #{forward_impl.1} parent=59 // pred_check_branch
        %1080 = sbr.rel (%p1078) target = $region64
      $region63: #{forward_impl.1} parent=59 // pred_region
        %p1081 = scmp.lt.s32.totalorder %s20, 1
        %s1082 = scalar_select %p1081, %s20, 1
        %s1083 = smul.addr %s1082, 4
        %s1084 = smul.addr %s1083, 8
        %s1085 = scalar_lea.vmem %s8, %s1084
      $region64: #{forward_impl.1} parent=59 // pred_fallthru
        _
    $region60: #{forward_impl.1} parent=5 // pred_fallthru
      _
  $region6: #{forward_impl.1} parent=0 // loop_footer
    %s18 = sadd.s32 1, %s14
  $region7: #{forward_impl.1} parent=0 // loop_footer_branch
    %13 = sbr.rel target = $region3
  $region8: #{forward_impl.1} parent=0 // loop_exit
    _

</llo_original>
